<compile_context>
chip_gen: v7x
topology: tpu7x:2x2x1
jax: 0.10.0
libtpu: 0.0.40
codegen_flags: <defaults>
</compile_context>

<pallas_src>
import functools

import jax
import jax.numpy as jnp
import numpy as np
from jax.experimental import pallas as pl
from jax.experimental.pallas import tpu as pltpu


def _fast_recip(x):
    """EUP approximate reciprocal + one Newton step (x is a small reduced array,
    so the large tiles only ever see multiplies, never a VALU divide)."""
    r = pl.reciprocal(x, approx=True)
    return r * (2.0 - x * r)


def _pt_partial_kernel(xpt_ref, col_ref, pt_ref, *, k2, inv_area):
    """Phase 1: softmax -> within-patch sum -> one-hot pool/unfold matmul.

    xpt_ref : (C, P2, T)     upsampled x, transposed-patch layout (one L_out tile)
    col_ref : (T, 1) int32   column of the single nonzero of `kall` per row
    pt_ref  : (C, P2*L_in)   per-tile partial of the unfolded pooled softmax
    """
    xpt = xpt_ref[...]                                     # (C, P2, T) f32

    # Channel softmax — pointwise in space, EUP reciprocal instead of a divide.
    mx = jnp.max(xpt, axis=0, keepdims=True)
    e = jnp.exp(xpt - mx)
    sm = e * _fast_recip(jnp.sum(e, axis=0, keepdims=True))

    # Sum over within-patch positions -> (C, T), lane-dense.
    u = jnp.sum(sm, axis=1)

    # One-hot selection matrix for this tile, built in-kernel from iota (the
    # old (L_out, P2*L_in) 0/1 HBM operand had exactly one 1 per row).
    col = col_ref[...]                                     # (T, 1) int32
    kiota = jax.lax.broadcasted_iota(jnp.int32, (col.shape[0], k2), 1)
    onehot = (col == kiota).astype(jnp.float32)            # (T, K2)

    # All-ones depthwise conv (stride=pool) / pool^2 + nn.Unfold + transpose,
    # restricted to this tile: a single K=T MXU matmul.
    pt_ref[...] = jnp.dot(u, onehot, preferred_element_type=jnp.float32) * inv_area


def _corr_kernel(xpt_ref, att_ref, pt_ref, out_ref):
    """Phase 2: attention correction + residual, one dense store per tile.

    xpt_ref : (C, P2, T)      upsampled x, transposed-patch layout
    att_ref : (C, L_in, T)    attentions, transposed (lane-dense)
    pt_ref  : (C, P2, L_in)   unfolded pooled softmax (full, tiny)
    out_ref : (C, P2, T)      correction * x + x
    """
    xpt = xpt_ref[...]
    att = att_ref[...]
    pt = pt_ref[...]

    # torch.count_nonzero(attentions, dim=-1) + 1e-5 (count over L_in),
    # normalization via the EUP reciprocal.
    nz = jnp.sum((att != 0.0).astype(jnp.float32), axis=1, keepdims=True) + 1e-5
    att_n = att * _fast_recip(nz)                          # (C, L_in, T)

    # corr[c, p, o] = sum_l pt[c, p, l] * att_n[c, l, o]   (batched over C).
    corr = jnp.einsum("cpl,clo->cpo", pt, att_n,
                      preferred_element_type=jnp.float32)

    # Residual; ONE lane/sublane-dense store of the whole (C, P2, T) tile.
    out_ref[...] = corr * xpt + xpt


def _pick_l_out_tile(l_out, max_tile):
    """Largest lane-aligned (multiple-of-128) divisor of l_out, capped at max_tile."""
    if l_out <= max_tile:
        return l_out
    t = (max_tile // 128) * 128
    while t >= 128:
        if l_out % t == 0:
            return t
        t -= 128
    return l_out  # no aligned divisor: fall back to one full-width tile


def decoder_forward(attentions, x, *, patch_size=2, att_depth=1, max_l_out_tile=2048):
    """JAX/Pallas equivalent of decoder.forward(attentions, x)."""
    N, C, H, W = x.shape
    att_depth_eff = att_depth + 2 if att_depth < 4 else 3
    pool = 2 ** att_depth_eff

    Hup, Wup = 4 * H, 4 * W
    P = patch_size
    Hh, Wh = Hup // pool, Wup // pool
    NH, NW = Hup // P, Wup // P               # upsampled patch grid
    NHh, NWh = Hh // P, Wh // P               # pooled patch grid
    L_out = NH * NW
    L_in = NHh * NWh
    P2 = P * P
    K2 = P2 * L_in
    assert attentions.shape == (N, C, L_out, L_in), attentions.shape
    assert Hup % pool == 0 and Wup % pool == 0
    assert Hh % P == 0 and Wh % P == 0
    # TODO(synk): the one-nonzero-per-row pooling map below needs pool % P == 0;
    # other pool/patch ratios would need a different index map.
    assert pool % P == 0
    m = pool // P

    # Spatial (L_out) tile. Approx f32 footprint (double-buffered, small
    # sublane dims padded to 8): ~2*(2*C*8 + C*max(L_in,8))*T*4 B — keep well
    # under v7x's 64 MiB physical VMEM (v5e/v6e have 128 MiB).
    T = _pick_l_out_tile(L_out, max_l_out_tile)
    assert L_out % T == 0
    n_tiles = L_out // T

    # F.interpolate(x, size=(4H,4W), mode='bilinear', align_corners=False).
    # TODO(synk): fold the separable bilinear upsample + patch transposes into
    # the kernels to remove these extra HBM passes at production sizes.
    x_up = jax.image.resize(x.astype(jnp.float32), (N, C, Hup, Wup), method="bilinear")

    # x_up in transposed-patch layout (lane-dense L_out last): (N, C, P*P, L_out)
    xpt = (
        x_up.reshape(N, C, NH, P, NW, P)
        .transpose(0, 1, 3, 5, 2, 4)
        .reshape(N, C, P2, L_out)
    )
    # attentions transposed so L_out is the lane dim: (N, C, L_in, L_out)
    att_t = attentions.astype(jnp.float32).transpose(0, 1, 3, 2)

    # Column index of the single nonzero of the (L_out, P2*L_in) pool/unfold
    # matrix per row: patch o -> pooled pixel (r, q) -> (within-patch p, l).
    o = np.arange(L_out, dtype=np.int64)
    bi, bj = o // NW, o % NW
    r, q = bi // m, bj // m
    col_np = ((r % P) * P + (q % P)) * L_in + ((r // P) * NWh + (q // P))
    col = jnp.asarray(col_np.reshape(L_out, 1).astype(np.int32))

    cparams = pltpu.CompilerParams(
        dimension_semantics=("parallel", "parallel"),
        vmem_limit_bytes=48 * 1024 * 1024,   # headroom below v7x's 64 MiB VMEM
    )

    # Kernel A: per-tile partials of the unfolded pooled softmax (tiny output).
    pt_parts = pl.pallas_call(
        functools.partial(_pt_partial_kernel, k2=K2, inv_area=1.0 / (pool * pool)),
        out_shape=jax.ShapeDtypeStruct((N, n_tiles, C, K2), jnp.float32),
        grid_spec=pltpu.PrefetchScalarGridSpec(
            num_scalar_prefetch=0,
            grid=(N, n_tiles),
            in_specs=[
                pl.BlockSpec((None, C, P2, T), lambda n, t: (n, 0, 0, t)),
                pl.BlockSpec((T, 1), lambda n, t: (t, 0)),
            ],
            out_specs=pl.BlockSpec((None, None, C, K2), lambda n, t: (n, t, 0, 0)),
        ),
        compiler_params=cparams,
    )(xpt, col)
    # Reduce the KB-sized per-tile partials in XLA and expose (p, l).
    pt = pt_parts.sum(axis=1).reshape(N, C, P2, L_in)

    # Kernel B: attention correction + residual, tiled over (N, L_out).
    out_pt = pl.pallas_call(
        _corr_kernel,
        out_shape=jax.ShapeDtypeStruct((N, C, P2, L_out), jnp.float32),
        grid_spec=pltpu.PrefetchScalarGridSpec(
            num_scalar_prefetch=0,
            grid=(N, n_tiles),
            in_specs=[
                pl.BlockSpec((None, C, P2, T), lambda n, t: (n, 0, 0, t)),
                pl.BlockSpec((None, C, L_in, T), lambda n, t: (n, 0, 0, t)),
                pl.BlockSpec((None, C, P2, L_in), lambda n, t: (n, 0, 0, 0)),
            ],
            out_specs=pl.BlockSpec((None, C, P2, T), lambda n, t: (n, 0, 0, t)),
        ),
        compiler_params=cparams,
    )(xpt, att_t, pt)

    # torch.nn.Fold(output=(Hup,Wup), kernel=P, stride=P): pure layout glue.
    out = (
        out_pt.reshape(N, C, P, P, NH, NW)
        .transpose(0, 1, 4, 2, 5, 3)
        .reshape(N, C, Hup, Wup)
    )
    return out, attentions


def decoder_forward_ref(attentions, x, *, patch_size=2, att_depth=1):
    """Pure-JAX reference of the same math (sanity check)."""
    N, C, H, W = x.shape
    d = att_depth + 2 if att_depth < 4 else 3
    pool = 2 ** d
    Hup, Wup = 4 * H, 4 * W
    x_up = jax.image.resize(x.astype(jnp.float32), (N, C, Hup, Wup), method="bilinear")
    p = jax.nn.softmax(x_up, axis=1)
    Hh, Wh = Hup // pool, Wup // pool
    argx = p.reshape(N, C, Hh, pool, Wh, pool).sum(axis=(3, 5)) / (pool * pool)
    P = patch_size
    L_in = (Hh // P) * (Wh // P)
    patches = (
        argx.reshape(N, C, Hh // P, P, Wh // P, P)
        .transpose(0, 1, 2, 4, 3, 5)
        .reshape(N, C, L_in, P * P)
    )
    nz = jnp.sum((attentions != 0).astype(jnp.float32), axis=-1, keepdims=True) + 1e-5
    corr_patch = jnp.einsum("ncoi,ncip->ncop", attentions / nz, patches)
    corr = (
        corr_patch.reshape(N, C, Hup // P, Wup // P, P, P)
        .transpose(0, 1, 2, 4, 3, 5)
        .reshape(N, C, Hup, Wup)
    )
    return corr * x_up + x_up, attentions


if __name__ == "__main__":
    # Shapes consistent with the module: out_channels=4, patch_size=2,
    # att_depth=1 (-> effective depth 3, pool factor 8).
    N, C, H, W = 2, 4, 16, 16
    P, att_depth = 2, 1
    pool = 2 ** (att_depth + 2)
    L_out = (4 * H // P) * (4 * W // P)                  # 1024
    L_in = (4 * H // pool // P) * (4 * W // pool // P)   # 16

    key = jax.random.PRNGKey(0)
    k1, k2 = jax.random.split(key)
    x = jax.random.normal(k1, (N, C, H, W), dtype=jnp.float32)
    # nonnegative attentions with zeros so count_nonzero is exercised
    attentions = jnp.maximum(
        jax.random.normal(k2, (N, C, L_out, L_in), dtype=jnp.float32), 0.0
    )

    # max_l_out_tile=256 -> 4 spatial tiles: exercises the two-phase
    # accumulation and gives 8 parallel grid steps for both kernels.
    fwd = jax.jit(
        functools.partial(
            decoder_forward, patch_size=P, att_depth=att_depth, max_l_out_tile=256
        )
    )
    out, att_out = fwd(attentions, x)
    out = jax.block_until_ready(out)

    ref, _ = decoder_forward_ref(attentions, x, patch_size=P, att_depth=att_depth)
    assert out.shape == (N, C, 4 * H, 4 * W)
    err = float(np.max(np.abs(np.asarray(out) - np.asarray(ref))))
    # Tolerance leaves margin for the EUP approximate-reciprocal paths.
    assert np.allclose(np.asarray(out), np.asarray(ref), atol=1e-3, rtol=1e-3), err
    print("KERNEL_OK")
</pallas_src>

<mosaic_0001>
module attributes {stable_mosaic.version = 11 : i64} {
  func.func @_pt_partial_kernel(%arg0: i32, %arg1: i32, %arg2: memref<1x4x4x256xf32, #tpu.memory_space<vmem>>, %arg3: memref<256x1xi32, #tpu.memory_space<vmem>>, %arg4: memref<1x1x4x64xf32, #tpu.memory_space<vmem>>) attributes {dimension_semantics = [#tpu.dimension_semantics<parallel>, #tpu.dimension_semantics<parallel>], iteration_bounds = array<i64: 2, 4>, scalar_prefetch = 0 : i64, scratch_operands = 0 : i64, tpu.core_type = #tpu.core_type<tc>, window_params = [{transform_indices = @transform_0, window_bounds = array<i64: 1, 4, 4, 256>}, {transform_indices = @transform_1, window_bounds = array<i64: 256, 1>}, {transform_indices = @transform_2, window_bounds = array<i64: 1, 1, 4, 64>}]} {
    %c0 = arith.constant 0 : index
    %c0_0 = arith.constant 0 : index
    %c0_1 = arith.constant 0 : index
    %c0_2 = arith.constant 0 : index
    %0 = vector.load %arg2[%c0, %c0_0, %c0_1, %c0_2] : memref<1x4x4x256xf32, #tpu.memory_space<vmem>>, vector<1x4x4x256xf32>
    %1 = vector.shape_cast %0 : vector<1x4x4x256xf32> to vector<4x4x256xf32>
    %cst = arith.constant dense<0xFF800000> : vector<4x256xf32>
    %2 = vector.multi_reduction <maximumf>, %1, %cst [0] : vector<4x4x256xf32> to vector<4x256xf32>
    %3 = vector.shape_cast %2 : vector<4x256xf32> to vector<1x4x256xf32>
    %4 = vector.broadcast %3 : vector<1x4x256xf32> to vector<4x4x256xf32>
    %5 = arith.subf %1, %4 : vector<4x4x256xf32>
    %6 = math.exp %5 : vector<4x4x256xf32>
    %cst_3 = arith.constant dense<0.000000e+00> : vector<4x256xf32>
    %7 = vector.multi_reduction <add>, %6, %cst_3 [0] : vector<4x4x256xf32> to vector<4x256xf32>
    %8 = vector.shape_cast %7 : vector<4x256xf32> to vector<1x4x256xf32>
    %9 = tpu.reciprocal %8 {approx = true} : vector<1x4x256xf32> -> vector<1x4x256xf32>
    %10 = arith.mulf %8, %9 : vector<1x4x256xf32>
    %cst_4 = arith.constant 2.000000e+00 : f32
    %11 = vector.broadcast %cst_4 : f32 to vector<1x4x256xf32>
    %12 = arith.subf %11, %10 : vector<1x4x256xf32>
    %13 = arith.mulf %9, %12 : vector<1x4x256xf32>
    %14 = vector.broadcast %13 : vector<1x4x256xf32> to vector<4x4x256xf32>
    %15 = arith.mulf %6, %14 : vector<4x4x256xf32>
    %cst_5 = arith.constant dense<0.000000e+00> : vector<4x256xf32>
    %16 = vector.multi_reduction <add>, %15, %cst_5 [1] : vector<4x4x256xf32> to vector<4x256xf32>
    %c0_6 = arith.constant 0 : index
    %c0_7 = arith.constant 0 : index
    %17 = vector.load %arg3[%c0_6, %c0_7] : memref<256x1xi32, #tpu.memory_space<vmem>>, vector<256x1xi32>
    %18 = tpu.iota {dimensions = array<i32: 1>} : vector<256x64xi32>
    %19 = vector.broadcast %17 : vector<256x1xi32> to vector<256x64xi32>
    %20 = arith.cmpi eq, %19, %18 : vector<256x64xi32>
    %21 = arith.extui %20 : vector<256x64xi1> to vector<256x64xi32>
    %22 = arith.sitofp %21 : vector<256x64xi32> to vector<256x64xf32>
    %cst_8 = arith.constant dense<0.000000e+00> : vector<4x64xf32>
    %23 = tpu.matmul %16, %22, %cst_8 {dimension_numbers = #tpu.dot_dimension_numbers<[1], [0], [0], [1], [0, 0, 1, 1], [], []>} : vector<4x256xf32>, vector<256x64xf32>, vector<4x64xf32> -> vector<4x64xf32>
    %cst_9 = arith.constant 1.562500e-02 : f32
    %24 = vector.broadcast %cst_9 : f32 to vector<4x64xf32>
    %25 = arith.mulf %23, %24 : vector<4x64xf32>
    %c0_10 = arith.constant 0 : index
    %c0_11 = arith.constant 0 : index
    %c0_12 = arith.constant 0 : index
    %c0_13 = arith.constant 0 : index
    %26 = vector.load %arg4[%c0_10, %c0_11, %c0_12, %c0_13] : memref<1x1x4x64xf32, #tpu.memory_space<vmem>>, vector<1x1x4x64xf32>
    %27 = vector.shape_cast %26 : vector<1x1x4x64xf32> to vector<4x64xf32>
    %28 = vector.shape_cast %25 : vector<4x64xf32> to vector<1x1x4x64xf32>
    tpu.vector_store %arg4[%c0_10, %c0_11, %c0_12, %c0_13], %28 {strides = array<i32>} : memref<1x1x4x64xf32, #tpu.memory_space<vmem>>, vector<1x1x4x64xf32>,
    return
  }
  func.func @transform_0(%arg0: i32, %arg1: i32) -> (i32, i32, i32, i32) {
    %c0_i32 = arith.constant 0 : i32
    %c0_i32_0 = arith.constant 0 : i32
    %c0_i32_1 = arith.constant 0 : i32
    return %arg0, %c0_i32, %c0_i32_0, %arg1 : i32, i32, i32, i32
  }
  func.func @transform_1(%arg0: i32, %arg1: i32) -> (i32, i32) {
    %c0_i32 = arith.constant 0 : i32
    %c0_i32_0 = arith.constant 0 : i32
    return %arg1, %c0_i32 : i32, i32
  }
  func.func @transform_2(%arg0: i32, %arg1: i32) -> (i32, i32, i32, i32) {
    %c0_i32 = arith.constant 0 : i32
    %c0_i32_0 = arith.constant 0 : i32
    %c0_i32_1 = arith.constant 0 : i32
    return %arg0, %arg1, %c0_i32, %c0_i32_0 : i32, i32, i32, i32
  }
}

module attributes {stable_mosaic.version = 11 : i64} {
  func.func @_corr_kernel(%arg0: i32, %arg1: i32, %arg2: memref<1x4x4x256xf32, #tpu.memory_space<vmem>>, %arg3: memref<1x4x16x256xf32, #tpu.memory_space<vmem>>, %arg4: memref<1x4x4x16xf32, #tpu.memory_space<vmem>>, %arg5: memref<1x4x4x256xf32, #tpu.memory_space<vmem>>) attributes {dimension_semantics = [#tpu.dimension_semantics<parallel>, #tpu.dimension_semantics<parallel>], iteration_bounds = array<i64: 2, 4>, scalar_prefetch = 0 : i64, scratch_operands = 0 : i64, tpu.core_type = #tpu.core_type<tc>, window_params = [{transform_indices = @transform_0, window_bounds = array<i64: 1, 4, 4, 256>}, {transform_indices = @transform_1, window_bounds = array<i64: 1, 4, 16, 256>}, {transform_indices = @transform_2, window_bounds = array<i64: 1, 4, 4, 16>}, {transform_indices = @transform_3, window_bounds = array<i64: 1, 4, 4, 256>}]} {
    %c0 = arith.constant 0 : index
    %c0_0 = arith.constant 0 : index
    %c0_1 = arith.constant 0 : index
    %c0_2 = arith.constant 0 : index
    %0 = vector.load %arg2[%c0, %c0_0, %c0_1, %c0_2] : memref<1x4x4x256xf32, #tpu.memory_space<vmem>>, vector<1x4x4x256xf32>
    %1 = vector.shape_cast %0 : vector<1x4x4x256xf32> to vector<4x4x256xf32>
    %c0_3 = arith.constant 0 : index
    %c0_4 = arith.constant 0 : index
    %c0_5 = arith.constant 0 : index
    %c0_6 = arith.constant 0 : index
    %2 = vector.load %arg3[%c0_3, %c0_4, %c0_5, %c0_6] : memref<1x4x16x256xf32, #tpu.memory_space<vmem>>, vector<1x4x16x256xf32>
    %3 = vector.shape_cast %2 : vector<1x4x16x256xf32> to vector<4x16x256xf32>
    %c0_7 = arith.constant 0 : index
    %c0_8 = arith.constant 0 : index
    %c0_9 = arith.constant 0 : index
    %c0_10 = arith.constant 0 : index
    %4 = vector.load %arg4[%c0_7, %c0_8, %c0_9, %c0_10] : memref<1x4x4x16xf32, #tpu.memory_space<vmem>>, vector<1x4x4x16xf32>
    %5 = vector.shape_cast %4 : vector<1x4x4x16xf32> to vector<4x4x16xf32>
    %cst = arith.constant 0.000000e+00 : f32
    %6 = vector.broadcast %cst : f32 to vector<4x16x256xf32>
    %7 = arith.cmpf one, %3, %6 : vector<4x16x256xf32>
    %8 = arith.extui %7 : vector<4x16x256xi1> to vector<4x16x256xi32>
    %9 = arith.sitofp %8 : vector<4x16x256xi32> to vector<4x16x256xf32>
    %cst_11 = arith.constant dense<0.000000e+00> : vector<4x256xf32>
    %10 = vector.multi_reduction <add>, %9, %cst_11 [1] : vector<4x16x256xf32> to vector<4x256xf32>
    %11 = vector.shape_cast %10 : vector<4x256xf32> to vector<4x1x256xf32>
    %cst_12 = arith.constant 9.99999974E-6 : f32
    %12 = vector.broadcast %cst_12 : f32 to vector<4x1x256xf32>
    %13 = arith.addf %11, %12 : vector<4x1x256xf32>
    %14 = tpu.reciprocal %13 {approx = true} : vector<4x1x256xf32> -> vector<4x1x256xf32>
    %15 = arith.mulf %13, %14 : vector<4x1x256xf32>
    %cst_13 = arith.constant 2.000000e+00 : f32
    %16 = vector.broadcast %cst_13 : f32 to vector<4x1x256xf32>
    %17 = arith.subf %16, %15 : vector<4x1x256xf32>
    %18 = arith.mulf %14, %17 : vector<4x1x256xf32>
    %19 = vector.broadcast %18 : vector<4x1x256xf32> to vector<4x16x256xf32>
    %20 = arith.mulf %3, %19 : vector<4x16x256xf32>
    "tpu.trace_start"() <{level = 10 : i32, message = "cpl,clo->cpo"}> : () -> ()
    %cst_14 = arith.constant dense<0.000000e+00> : vector<4x4x256xf32>
    %21 = tpu.matmul %5, %20, %cst_14 {dimension_numbers = #tpu.dot_dimension_numbers<[2], [1], [1], [2], [0, 0, 0, 1, 1, 2], [0], [0]>} : vector<4x4x16xf32>, vector<4x16x256xf32>, vector<4x4x256xf32> -> vector<4x4x256xf32>
    "tpu.trace_stop"() : () -> ()
    %22 = arith.mulf %21, %1 : vector<4x4x256xf32>
    %23 = arith.addf %22, %1 : vector<4x4x256xf32>
    %c0_15 = arith.constant 0 : index
    %c0_16 = arith.constant 0 : index
    %c0_17 = arith.constant 0 : index
    %c0_18 = arith.constant 0 : index
    %24 = vector.load %arg5[%c0_15, %c0_16, %c0_17, %c0_18] : memref<1x4x4x256xf32, #tpu.memory_space<vmem>>, vector<1x4x4x256xf32>
    %25 = vector.shape_cast %24 : vector<1x4x4x256xf32> to vector<4x4x256xf32>
    %26 = vector.shape_cast %23 : vector<4x4x256xf32> to vector<1x4x4x256xf32>
    tpu.vector_store %arg5[%c0_15, %c0_16, %c0_17, %c0_18], %26 {strides = array<i32>} : memref<1x4x4x256xf32, #tpu.memory_space<vmem>>, vector<1x4x4x256xf32>,
    return
  }
  func.func @transform_0(%arg0: i32, %arg1: i32) -> (i32, i32, i32, i32) {
    %c0_i32 = arith.constant 0 : i32
    %c0_i32_0 = arith.constant 0 : i32
    %c0_i32_1 = arith.constant 0 : i32
    return %arg0, %c0_i32, %c0_i32_0, %arg1 : i32, i32, i32, i32
  }
  func.func @transform_1(%arg0: i32, %arg1: i32) -> (i32, i32, i32, i32) {
    %c0_i32 = arith.constant 0 : i32
    %c0_i32_0 = arith.constant 0 : i32
    %c0_i32_1 = arith.constant 0 : i32
    return %arg0, %c0_i32, %c0_i32_0, %arg1 : i32, i32, i32, i32
  }
  func.func @transform_2(%arg0: i32, %arg1: i32) -> (i32, i32, i32, i32) {
    %c0_i32 = arith.constant 0 : i32
    %c0_i32_0 = arith.constant 0 : i32
    %c0_i32_1 = arith.constant 0 : i32
    %c0_i32_2 = arith.constant 0 : i32
    return %arg0, %c0_i32, %c0_i32_0, %c0_i32_1 : i32, i32, i32, i32
  }
  func.func @transform_3(%arg0: i32, %arg1: i32) -> (i32, i32, i32, i32) {
    %c0_i32 = arith.constant 0 : i32
    %c0_i32_0 = arith.constant 0 : i32
    %c0_i32_1 = arith.constant 0 : i32
    return %arg0, %c0_i32, %c0_i32_0, %arg1 : i32, i32, i32, i32
  }
}

</mosaic_0001>

<llo_original>
// kernel: decoder_forward.3
$region0: #{decoder_forward.3}
  #allocation0 [shape = 'u32[]', space=smem, size = 0x4, offset = 0x4, fixed_abs, tag = 'smem constant byte address 0x4 - core index']
  #allocation1 [shape = 'u32[144,128]{1,0:T(1,128)}', space=vmem, size = 0x12000, scoped, tag = 'internal scratch']
  %s0 = inlined_call_operand.vmem [shape: f32[2,4,4,1024], index: 0, kind: input, shape index: {}]
  %s1 = inlined_call_operand.vmem [shape: f32[2,4,16,1024], index: 1, kind: input, shape index: {}]
  %s2 = inlined_call_operand.vmem [shape: f32[2,4,4,16], index: 2, kind: input, shape index: {}]
  %s3 = inlined_call_operand.vmem [shape: f32[2,4,4,1024], index: 3, kind: output, shape index: {}]
  %s4 = sld [smem:[#allocation0]]
  $region140: #{decoder_forward.3} parent=0
    _
  %s6 = ssub.s32 1, %s4
  %s7 = scalar_select 0, %s6, %s4
  $region1: #{decoder_forward.3} parent=0
    #allocation2 [shape = 'u8[32768]{0}', space=vmem, size = 0x8000, scoped, tag = 'input window, operand 0']
    #allocation3 [shape = 'u8[131072]{0}', space=vmem, size = 0x20000, scoped, tag = 'input window, operand 1']
    #allocation4 [shape = 'u8[32768]{0}', space=vmem, size = 0x8000, scoped, tag = 'output window, operand 0']
    loop: start=0, step=1, limit=10
    $region2: #{decoder_forward.3} parent=1 // loop_pre_header
      _
    $region3: #{decoder_forward.3} parent=1 // loop_header
      %s9 = sphi 0, %s13
      %p10 = scmp.ge.s32.totalorder %s9, 10
      %s16 = sphi 0, %s28
      %s17 = sphi 0, %s24
      %s18 = sphi 0, %s16
      %s19 = sphi 0, %s17
      %s20 = sphi 0, %s18
      %s21 = sphi 0, %s19
      %s33 = sphi 0, %s35
      %s36 = sphi 0, %s33
      %s37 = sphi 0, %s36
      %s53 = sphi 0, %s37
      %s61 = sphi 0, %s63
      %s64 = sphi 0, %s61
      %s65 = sphi 0, %s64
      %s81 = sphi 0, %s65
      %s87 = sphi 0, %s89
      %s90 = sphi 0, %s87
      %s91 = sphi 0, %s90
      %s107 = sphi 0, %s91
      %s115 = sphi 0, %s117
      %s118 = sphi 0, %s115
      %s119 = sphi 0, %s118
      %s135 = sphi 0, %s119
    $region4: #{decoder_forward.3} parent=1 // loop_header_branch
      %12 = sbr.rel (%p10) target = $region8
    $region5: #{decoder_forward.3} parent=1 // loop_body
      %s14 = ssub.s32 %s9, 1
      %s15 = ssub.s32 %s9, 2
      %s22 = sadd.s32 1, %s17
      %p23 = scmp.ge.s32.totalorder %s22, 4
      %s24 = scalar_select %p23, 0, %s22
      %s25 = sadd.s32 1, %s16
      %s26 = scalar_select %p23, %s25, %s16
      %p27 = scmp.ge.s32.totalorder %s26, 2
      %s28 = scalar_select %p27, 0, %s26
      %s29 = ssub.s32 %s16, %s28
      %s30 = ssub.s32 %s17, %s24
      %s31 = sor.u32 %s29, %s30
      %p32 = scmp.eq.s32.totalorder %s31, 0
      %s34 = sadd.s32 %s33, 1
      %s35 = scalar_select %p32, %s33, %s34
      %p38 = pneg %p32
      %p39 = scmp.eq.s32.totalorder %s9, 7
      %p40 = por %p38, %p39
      %p41 = scmp.ne.s32.totalorder %s33, %s36
      %p42 = scmp.eq.s32.totalorder %s9, 0
      %p43 = por %p41, %p42
      %p44 = scmp.ne.s32.totalorder %s33, %s36
      %p45 = scmp.eq.s32.totalorder %s14, 7
      %p46 = por %p44, %p45
      %p47 = scmp.ne.s32.totalorder %s36, %s37
      %p48 = scmp.eq.s32.totalorder %s14, 0
      %p49 = por %p47, %p48
      %p50 = scmp.ne.s32.totalorder %s36, %s37
      %p51 = scmp.eq.s32.totalorder %s15, 7
      %p52 = por %p50, %p51
      %p54 = scmp.ne.s32.totalorder %s37, %s53
      %p55 = scmp.eq.s32.totalorder %s15, 0
      %p56 = por %p54, %p55
      %s57 = ssub.s32 %s16, %s28
      %s58 = ssub.s32 %s17, %s24
      %s59 = sor.u32 %s57, %s58
      %p60 = scmp.eq.s32.totalorder %s59, 0
      %s62 = sadd.s32 %s61, 1
      %s63 = scalar_select %p60, %s61, %s62
      %p66 = pneg %p60
      %p67 = scmp.eq.s32.totalorder %s9, 7
      %p68 = por %p66, %p67
      %p69 = scmp.ne.s32.totalorder %s61, %s64
      %p70 = scmp.eq.s32.totalorder %s9, 0
      %p71 = por %p69, %p70
      %p72 = scmp.ne.s32.totalorder %s61, %s64
      %p73 = scmp.eq.s32.totalorder %s14, 7
      %p74 = por %p72, %p73
      %p75 = scmp.ne.s32.totalorder %s64, %s65
      %p76 = scmp.eq.s32.totalorder %s14, 0
      %p77 = por %p75, %p76
      %p78 = scmp.ne.s32.totalorder %s64, %s65
      %p79 = scmp.eq.s32.totalorder %s15, 7
      %p80 = por %p78, %p79
      %p82 = scmp.ne.s32.totalorder %s65, %s81
      %p83 = scmp.eq.s32.totalorder %s15, 0
      %p84 = por %p82, %p83
      %s85 = ssub.s32 %s16, %s28
      %p86 = scmp.eq.s32.totalorder %s85, 0
      %s88 = sadd.s32 %s87, 1
      %s89 = scalar_select %p86, %s87, %s88
      %p92 = pneg %p86
      %p93 = scmp.eq.s32.totalorder %s9, 7
      %p94 = por %p92, %p93
      %p95 = scmp.ne.s32.totalorder %s87, %s90
      %p96 = scmp.eq.s32.totalorder %s9, 0
      %p97 = por %p95, %p96
      %p98 = scmp.ne.s32.totalorder %s87, %s90
      %p99 = scmp.eq.s32.totalorder %s14, 7
      %p100 = por %p98, %p99
      %p101 = scmp.ne.s32.totalorder %s90, %s91
      %p102 = scmp.eq.s32.totalorder %s14, 0
      %p103 = por %p101, %p102
      %p104 = scmp.ne.s32.totalorder %s90, %s91
      %p105 = scmp.eq.s32.totalorder %s15, 7
      %p106 = por %p104, %p105
      %p108 = scmp.ne.s32.totalorder %s91, %s107
      %p109 = scmp.eq.s32.totalorder %s15, 0
      %p110 = por %p108, %p109
      %s111 = ssub.s32 %s16, %s28
      %s112 = ssub.s32 %s17, %s24
      %s113 = sor.u32 %s111, %s112
      %p114 = scmp.eq.s32.totalorder %s113, 0
      %s116 = sadd.s32 %s115, 1
      %s117 = scalar_select %p114, %s115, %s116
      %p120 = pneg %p114
      %p121 = scmp.eq.s32.totalorder %s9, 7
      %p122 = por %p120, %p121
      %p123 = scmp.ne.s32.totalorder %s115, %s118
      %p124 = scmp.eq.s32.totalorder %s9, 0
      %p125 = por %p123, %p124
      %p126 = scmp.ne.s32.totalorder %s115, %s118
      %p127 = scmp.eq.s32.totalorder %s14, 7
      %p128 = por %p126, %p127
      %p129 = scmp.ne.s32.totalorder %s118, %s119
      %p130 = scmp.eq.s32.totalorder %s14, 0
      %p131 = por %p129, %p130
      %p132 = scmp.ne.s32.totalorder %s118, %s119
      %p133 = scmp.eq.s32.totalorder %s15, 7
      %p134 = por %p132, %p133
      %p136 = scmp.ne.s32.totalorder %s119, %s135
      %p137 = scmp.eq.s32.totalorder %s15, 0
      %p138 = por %p136, %p137
      %p139 = scmp.le.s32.totalorder 1, %s9
      %p140 = scmp.lt.s32.totalorder %s9, 9
      %p141 = pnand %p139, %p140
      %p142 = pneg %p141
      // Predicated region
      $region9: #{decoder_forward.3} parent=5 // pred_check
        _
      $region10: #{decoder_forward.3} parent=5 // pred_check_branch
        %144 = sbr.rel (%p141) target = $region12
      $region11: #{decoder_forward.3} parent=5 // pred_region
        %s145 = ssub.s32 %s9, 1
      $region12: #{decoder_forward.3} parent=5 // pred_fallthru
        _
      %p146 = scmp.lt.s32.totalorder %s9, 8
      // Predicated region
      $region13: #{decoder_forward.3} parent=5 // pred_check
        %p147 = pneg %p146
      $region14: #{decoder_forward.3} parent=5 // pred_check_branch
        %149 = sbr.rel (%p147) target = $region16
      $region15: #{decoder_forward.3} parent=5 // pred_region
        // Predicated region
        $region17: #{decoder_forward.3} parent=15 // pred_check
          %p150 = pneg %p43
        $region18: #{decoder_forward.3} parent=15 // pred_check_branch
          %152 = sbr.rel (%p150) target = $region20
        $region19: #{decoder_forward.3} parent=15 // pred_region
          %s153 = sand.u32 %s33, 1
          %s154 = sand.u32 %s33, 1
          %s155 = smul.addr %s154, 32
          %s156 = scalar_lea.vmem [#allocation2], %s155
          %s157 = smul.u32 2, %s17
          %s158 = smul.addr %s16, 32
          %s159 = sadd.s32 %s157, %s158
          %s160 = smul.addr %s159, 4
          %s161 = scalar_lea.vmem %s0, %s160
          // Predicated region
          $region21: #{decoder_forward.3} parent=19 // pred_check
            _
          $region22: #{decoder_forward.3} parent=19 // pred_check_branch
            %163 = sbr.rel (0) target = $region24
          $region23: #{decoder_forward.3} parent=19 // pred_region
            // Predicated region
            $region25: #{decoder_forward.3} parent=23 // pred_check
              _
            $region26: #{decoder_forward.3} parent=23 // pred_check_branch
              %165 = sbr.rel (0) target = $region28
            $region27: #{decoder_forward.3} parent=23 // pred_region
              // Predicated region
              $region40: #{decoder_forward.3} parent=27 // pred_check
                _
              $region41: #{decoder_forward.3} parent=27 // pred_check_branch
                %186 = sbr.rel (0) target = $region43
              $region42: #{decoder_forward.3} parent=27 // pred_region
                loop: start=0, step=1, limit=1
                $region44: #{decoder_forward.3} parent=42 // loop_pre_header
                  _
                $region45: #{decoder_forward.3} parent=42 // loop_header
                  %s188 = sphi 0, %s192
                  %p189 = scmp.ge.s32.totalorder %s188, 1
                  %s193 = sphi %s161, %s161
                  %s194 = sphi %s156, %s156
                $region46: #{decoder_forward.3} parent=42 // loop_header_branch
                  %191 = sbr.rel (%p189) target = $region50
                $region47: #{decoder_forward.3} parent=42 // loop_body
                  %v195 = vld [vmem:[%s193] sm:$0xff]
                  %196 = vst [vmem:[%s194] sm:$0xff] %v195
                  %v197 = vld [vmem:[%s193 + $0x20] sm:$0xff]
                  %198 = vst [vmem:[%s194 + $0x8] sm:$0xff] %v197
                  %v199 = vld [vmem:[%s193 + $0x40] sm:$0xff]
                  %200 = vst [vmem:[%s194 + $0x10] sm:$0xff] %v199
                  %v201 = vld [vmem:[%s193 + $0x60] sm:$0xff]
                  %202 = vst [vmem:[%s194 + $0x18] sm:$0xff] %v201
                $region48: #{decoder_forward.3} parent=42 // loop_footer
                  %s192 = sadd.s32 1, %s188
                $region49: #{decoder_forward.3} parent=42 // loop_footer_branch
                  %187 = sbr.rel target = $region45
                $region50: #{decoder_forward.3} parent=42 // loop_exit
                  _
              $region43: #{decoder_forward.3} parent=27 // pred_fallthru
                _
              // Predicated region
              $region51: #{decoder_forward.3} parent=27 // pred_check
                _
              $region52: #{decoder_forward.3} parent=27 // pred_check_branch
                %204 = sbr.rel target = $region54
              $region53: #{decoder_forward.3} parent=27 // pred_region
                _
              $region54: #{decoder_forward.3} parent=27 // pred_fallthru
                _
            $region28: #{decoder_forward.3} parent=23 // pred_fallthru
              _
            // Predicated region
            $region29: #{decoder_forward.3} parent=23 // pred_check
              _
            $region30: #{decoder_forward.3} parent=23 // pred_check_branch
              %167 = sbr.rel target = $region32
            $region31: #{decoder_forward.3} parent=23 // pred_region
              loop: start=0, step=1, limit=1
              $region33: #{decoder_forward.3} parent=31 // loop_pre_header
                _
              $region34: #{decoder_forward.3} parent=31 // loop_header
                %s170 = sphi 0, %s174
                %p171 = scmp.ge.s32.totalorder %s170, 1
                %s175 = sphi %s161, %s161
                %s176 = sphi %s156, %s156
              $region35: #{decoder_forward.3} parent=31 // loop_header_branch
                %173 = sbr.rel (%p171) target = $region39
              $region36: #{decoder_forward.3} parent=31 // loop_body
                %v177 = vld [vmem:[%s175] sm:$0xff]
                %178 = vst [vmem:[%s176] sm:$0xff] %v177
                %v179 = vld [vmem:[%s175 + $0x20] sm:$0xff]
                %180 = vst [vmem:[%s176 + $0x8] sm:$0xff] %v179
                %v181 = vld [vmem:[%s175 + $0x40] sm:$0xff]
                %182 = vst [vmem:[%s176 + $0x10] sm:$0xff] %v181
                %v183 = vld [vmem:[%s175 + $0x60] sm:$0xff]
                %184 = vst [vmem:[%s176 + $0x18] sm:$0xff] %v183
              $region37: #{decoder_forward.3} parent=31 // loop_footer
                %s174 = sadd.s32 1, %s170
              $region38: #{decoder_forward.3} parent=31 // loop_footer_branch
                %169 = sbr.rel target = $region34
              $region39: #{decoder_forward.3} parent=31 // loop_exit
                _
            $region32: #{decoder_forward.3} parent=23 // pred_fallthru
              _
          $region24: #{decoder_forward.3} parent=19 // pred_fallthru
            _
          %205 = vnop
        $region20: #{decoder_forward.3} parent=15 // pred_fallthru
          _
        // Predicated region
        $region55: #{decoder_forward.3} parent=15 // pred_check
          %p206 = pneg %p71
        $region56: #{decoder_forward.3} parent=15 // pred_check_branch
          %208 = sbr.rel (%p206) target = $region58
        $region57: #{decoder_forward.3} parent=15 // pred_region
          %s209 = sand.u32 %s61, 1
          %s210 = sand.u32 %s61, 1
          %s211 = smul.addr %s210, 128
          %s212 = scalar_lea.vmem [#allocation3], %s211
          %s213 = smul.u32 2, %s17
          %s214 = smul.addr %s16, 64
          %s215 = sadd.s32 %s213, %s214
          %s216 = smul.addr %s215, 8
          %s217 = scalar_lea.vmem %s1, %s216
          // Predicated region
          $region59: #{decoder_forward.3} parent=57 // pred_check
            _
          $region60: #{decoder_forward.3} parent=57 // pred_check_branch
            %219 = sbr.rel (0) target = $region62
          $region61: #{decoder_forward.3} parent=57 // pred_region
            // Predicated region
            $region63: #{decoder_forward.3} parent=61 // pred_check
              _
            $region64: #{decoder_forward.3} parent=61 // pred_check_branch
              %221 = sbr.rel (0) target = $region66
            $region65: #{decoder_forward.3} parent=61 // pred_region
              loop: start=0, step=1, limit=1
              $region67: #{decoder_forward.3} parent=65 // loop_pre_header
                _
              $region68: #{decoder_forward.3} parent=65 // loop_header
                %s223 = sphi 0, %s227
                %p224 = scmp.ge.s32.totalorder %s223, 1
                %s228 = sphi %s217, %s217
                %s229 = sphi %s212, %s212
              $region69: #{decoder_forward.3} parent=65 // loop_header_branch
                %226 = sbr.rel (%p224) target = $region73
              $region70: #{decoder_forward.3} parent=65 // loop_body
                %v230 = vld [vmem:[%s228] sm:$0xff]
                %231 = vst [vmem:[%s229] sm:$0xff] %v230
                %v232 = vld [vmem:[%s228 + $0x8] sm:$0xff]
                %233 = vst [vmem:[%s229 + $0x8] sm:$0xff] %v232
                %v234 = vld [vmem:[%s228 + $0x40] sm:$0xff]
                %235 = vst [vmem:[%s229 + $0x10] sm:$0xff] %v234
                %v236 = vld [vmem:[%s228 + $0x48] sm:$0xff]
                %237 = vst [vmem:[%s229 + $0x18] sm:$0xff] %v236
                %v238 = vld [vmem:[%s228 + $0x80] sm:$0xff]
                %239 = vst [vmem:[%s229 + $0x20] sm:$0xff] %v238
                %v240 = vld [vmem:[%s228 + $0x88] sm:$0xff]
                %241 = vst [vmem:[%s229 + $0x28] sm:$0xff] %v240
                %v242 = vld [vmem:[%s228 + $0xc0] sm:$0xff]
                %243 = vst [vmem:[%s229 + $0x30] sm:$0xff] %v242
                %v244 = vld [vmem:[%s228 + $0xc8] sm:$0xff]
                %245 = vst [vmem:[%s229 + $0x38] sm:$0xff] %v244
                %v246 = vld [vmem:[%s228 + $0x100] sm:$0xff]
                %247 = vst [vmem:[%s229 + $0x40] sm:$0xff] %v246
                %v248 = vld [vmem:[%s228 + $0x108] sm:$0xff]
                %249 = vst [vmem:[%s229 + $0x48] sm:$0xff] %v248
                %v250 = vld [vmem:[%s228 + $0x140] sm:$0xff]
                %251 = vst [vmem:[%s229 + $0x50] sm:$0xff] %v250
                %v252 = vld [vmem:[%s228 + $0x148] sm:$0xff]
                %253 = vst [vmem:[%s229 + $0x58] sm:$0xff] %v252
                %v254 = vld [vmem:[%s228 + $0x180] sm:$0xff]
                %255 = vst [vmem:[%s229 + $0x60] sm:$0xff] %v254
                %v256 = vld [vmem:[%s228 + $0x188] sm:$0xff]
                %257 = vst [vmem:[%s229 + $0x68] sm:$0xff] %v256
                %v258 = vld [vmem:[%s228 + $0x1c0] sm:$0xff]
                %259 = vst [vmem:[%s229 + $0x70] sm:$0xff] %v258
                %v260 = vld [vmem:[%s228 + $0x1c8] sm:$0xff]
                %261 = vst [vmem:[%s229 + $0x78] sm:$0xff] %v260
              $region71: #{decoder_forward.3} parent=65 // loop_footer
                %s227 = sadd.s32 1, %s223
              $region72: #{decoder_forward.3} parent=65 // loop_footer_branch
                %222 = sbr.rel target = $region68
              $region73: #{decoder_forward.3} parent=65 // loop_exit
                _
            $region66: #{decoder_forward.3} parent=61 // pred_fallthru
              _
            // Predicated region
            $region74: #{decoder_forward.3} parent=61 // pred_check
              _
            $region75: #{decoder_forward.3} parent=61 // pred_check_branch
              %263 = sbr.rel target = $region77
            $region76: #{decoder_forward.3} parent=61 // pred_region
              _
            $region77: #{decoder_forward.3} parent=61 // pred_fallthru
              _
          $region62: #{decoder_forward.3} parent=57 // pred_fallthru
            _
          %264 = vnop
        $region58: #{decoder_forward.3} parent=15 // pred_fallthru
          _
        // Predicated region
        $region78: #{decoder_forward.3} parent=15 // pred_check
          %p265 = pneg %p97
        $region79: #{decoder_forward.3} parent=15 // pred_check_branch
          %267 = sbr.rel (%p265) target = $region81
        $region80: #{decoder_forward.3} parent=15 // pred_region
          %p268 = scmp.lt.s32.totalorder %s16, 1
          %s269 = scalar_select %p268, %s16, 1
          %s270 = smul.addr %s269, 4
          %s271 = smul.addr %s270, 4
          %s272 = scalar_lea.vmem %s2, %s271
        $region81: #{decoder_forward.3} parent=15 // pred_fallthru
          _
      $region16: #{decoder_forward.3} parent=5 // pred_fallthru
        _
      %p273 = scmp.le.s32.totalorder 1, %s9
      %p274 = scmp.lt.s32.totalorder %s9, 9
      %p275 = pnand %p273, %p274
      %p276 = pneg %p275
      // Predicated region
      $region82: #{decoder_forward.3} parent=5 // pred_check
        _
      $region83: #{decoder_forward.3} parent=5 // pred_check_branch
        %278 = sbr.rel (%p275) target = $region85
      $region84: #{decoder_forward.3} parent=5 // pred_region
        %s279 = ssub.s32 %s9, 1
        %s280 = sand.u32 %s36, 1
        %s281 = sand.u32 %s36, 1
        %s282 = smul.addr %s281, 32
        %s283 = scalar_lea.vmem [#allocation2], %s282
        // Predicated region
        $region86: #{decoder_forward.3} parent=84 // pred_check
          %p284 = pneg %p49
        $region87: #{decoder_forward.3} parent=84 // pred_check_branch
          %286 = sbr.rel (%p284) target = $region89
        $region88: #{decoder_forward.3} parent=84 // pred_region
          _
        $region89: #{decoder_forward.3} parent=84 // pred_fallthru
          _
        %s287 = sand.u32 %s64, 1
        %s288 = sand.u32 %s64, 1
        %s289 = smul.addr %s288, 128
        %s290 = scalar_lea.vmem [#allocation3], %s289
        // Predicated region
        $region90: #{decoder_forward.3} parent=84 // pred_check
          %p291 = pneg %p77
        $region91: #{decoder_forward.3} parent=84 // pred_check_branch
          %293 = sbr.rel (%p291) target = $region93
        $region92: #{decoder_forward.3} parent=84 // pred_region
          _
        $region93: #{decoder_forward.3} parent=84 // pred_fallthru
          _
        %s294 = sand.u32 %s36, 1
        %s295 = sand.u32 %s36, 1
        %s296 = smul.addr %s295, 32
        %s297 = scalar_lea.vmem [#allocation2], %s296
        %p298 = pneg %p49
        %p299 = pneg %p46
        %s300 = sand.u32 %s64, 1
        %s301 = sand.u32 %s64, 1
        %s302 = smul.addr %s301, 128
        %s303 = scalar_lea.vmem [#allocation3], %s302
        %p304 = pneg %p77
        %p305 = pneg %p74
        %p306 = scmp.lt.s32.totalorder %s18, 1
        %s307 = scalar_select %p306, %s18, 1
        %s308 = smul.addr %s307, 4
        %s309 = smul.addr %s308, 4
        %s310 = scalar_lea.vmem %s2, %s309
        %p311 = pneg %p103
        %p312 = pneg %p100
        %p313 = pneg %p131
        %p314 = pneg %p128
        %s315 = sand.u32 %s118, 1
        %s316 = sand.u32 %s118, 1
        %s317 = smul.addr %s316, 32
        %s318 = scalar_lea.vmem [#allocation4], %s317
        %s319 = smul.u32 2, %s19
        %s320 = smul.u32 2, %s19
        %p321 = scmp.lt.s32.totalorder %s18, 1
        %s322 = scalar_select %p321, %s18, 1
        %s323 = smul.addr %s322, 4
        %s324 = smul.addr %s323, 4
        %s325 = scalar_lea.vmem %s2, %s324
        %s326 = smul.u32 2, %s19
        %v327 = vld [vmem:[%s283] sm:$0xff]
        %v328 = vld [vmem:[%s283 + $0x8] sm:$0xff]
        %v329 = vld [vmem:[%s283 + $0x10] sm:$0xff]
        %v330 = vld [vmem:[%s283 + $0x18] sm:$0xff]
        %v331 = vld [vmem:[%s290] sm:$0xff]
        %v332 = vld [vmem:[%s290 + $0x8] sm:$0xff]
        %v333 = vld [vmem:[%s290 + $0x10] sm:$0xff]
        %v334 = vld [vmem:[%s290 + $0x18] sm:$0xff]
        %v335 = vld [vmem:[%s290 + $0x20] sm:$0xff]
        %v336 = vld [vmem:[%s290 + $0x28] sm:$0xff]
        %v337 = vld [vmem:[%s290 + $0x30] sm:$0xff]
        %v338 = vld [vmem:[%s290 + $0x38] sm:$0xff]
        %v339 = vld [vmem:[%s290 + $0x40] sm:$0xff]
        %v340 = vld [vmem:[%s290 + $0x48] sm:$0xff]
        %v341 = vld [vmem:[%s290 + $0x50] sm:$0xff]
        %v342 = vld [vmem:[%s290 + $0x58] sm:$0xff]
        %v343 = vld [vmem:[%s290 + $0x60] sm:$0xff]
        %v344 = vld [vmem:[%s290 + $0x68] sm:$0xff]
        %v345 = vld [vmem:[%s290 + $0x70] sm:$0xff]
        %v346 = vld [vmem:[%s290 + $0x78] sm:$0xff]
        %v347 = vld [vmem:[%s325] sm:$0xf]
        %v348 = vld [vmem:[%s325 + $0x4] sm:$0xf]
        %v349 = vld [vmem:[%s325 + $0x8] sm:$0xf]
        %v350 = vld [vmem:[%s325 + $0xc] sm:$0xf]
        %vm351 = vcmp.ne.f32.partialorder %v331, 0.0
        %vm352 = vcmp.ne.f32.partialorder %v332, 0.0
        %vm353 = vcmp.ne.f32.partialorder %v333, 0.0
        %vm354 = vcmp.ne.f32.partialorder %v334, 0.0
        %vm355 = vcmp.ne.f32.partialorder %v335, 0.0
        %vm356 = vcmp.ne.f32.partialorder %v336, 0.0
        %vm357 = vcmp.ne.f32.partialorder %v337, 0.0
        %vm358 = vcmp.ne.f32.partialorder %v338, 0.0
        %vm359 = vcmp.ne.f32.partialorder %v339, 0.0
        %vm360 = vcmp.ne.f32.partialorder %v340, 0.0
        %vm361 = vcmp.ne.f32.partialorder %v341, 0.0
        %vm362 = vcmp.ne.f32.partialorder %v342, 0.0
        %vm363 = vcmp.ne.f32.partialorder %v343, 0.0
        %vm364 = vcmp.ne.f32.partialorder %v344, 0.0
        %vm365 = vcmp.ne.f32.partialorder %v345, 0.0
        %vm366 = vcmp.ne.f32.partialorder %v346, 0.0
        %v367 = vsel %vm351, 1, 0
        %v368 = vsel %vm352, 1, 0
        %v369 = vsel %vm353, 1, 0
        %v370 = vsel %vm354, 1, 0
        %v371 = vsel %vm355, 1, 0
        %v372 = vsel %vm356, 1, 0
        %v373 = vsel %vm357, 1, 0
        %v374 = vsel %vm358, 1, 0
        %v375 = vsel %vm359, 1, 0
        %v376 = vsel %vm360, 1, 0
        %v377 = vsel %vm361, 1, 0
        %v378 = vsel %vm362, 1, 0
        %v379 = vsel %vm363, 1, 0
        %v380 = vsel %vm364, 1, 0
        %v381 = vsel %vm365, 1, 0
        %v382 = vsel %vm366, 1, 0
        %v383 = vcvt.s32.f32 %v367
        %v384 = vcvt.s32.f32 %v368
        %v385 = vcvt.s32.f32 %v369
        %v386 = vcvt.s32.f32 %v370
        %v387 = vcvt.s32.f32 %v371
        %v388 = vcvt.s32.f32 %v372
        %v389 = vcvt.s32.f32 %v373
        %v390 = vcvt.s32.f32 %v374
        %v391 = vcvt.s32.f32 %v375
        %v392 = vcvt.s32.f32 %v376
        %v393 = vcvt.s32.f32 %v377
        %v394 = vcvt.s32.f32 %v378
        %v395 = vcvt.s32.f32 %v379
        %v396 = vcvt.s32.f32 %v380
        %v397 = vcvt.s32.f32 %v381
        %v398 = vcvt.s32.f32 %v382
        %v399 = vadd.f32 %v383, %v385
        %v400 = vrot.slane %v399, 4
        %v401 = vadd.f32 %v399, %v400
        %v402 = vrot.slane %v401, 2
        %v403 = vadd.f32 %v401, %v402
        %v404 = vrot.slane %v403, 1
        %v405 = vadd.f32 %v403, %v404
        %v406 = vadd.f32 %v384, %v386
        %v407 = vrot.slane %v406, 4
        %v408 = vadd.f32 %v406, %v407
        %v409 = vrot.slane %v408, 2
        %v410 = vadd.f32 %v408, %v409
        %v411 = vrot.slane %v410, 1
        %v412 = vadd.f32 %v410, %v411
        %v413 = vadd.f32 %v387, %v389
        %v414 = vrot.slane %v413, 4
        %v415 = vadd.f32 %v413, %v414
        %v416 = vrot.slane %v415, 2
        %v417 = vadd.f32 %v415, %v416
        %v418 = vrot.slane %v417, 1
        %v419 = vadd.f32 %v417, %v418
        %v420 = vadd.f32 %v388, %v390
        %v421 = vrot.slane %v420, 4
        %v422 = vadd.f32 %v420, %v421
        %v423 = vrot.slane %v422, 2
        %v424 = vadd.f32 %v422, %v423
        %v425 = vrot.slane %v424, 1
        %v426 = vadd.f32 %v424, %v425
        %v427 = vadd.f32 %v391, %v393
        %v428 = vrot.slane %v427, 4
        %v429 = vadd.f32 %v427, %v428
        %v430 = vrot.slane %v429, 2
        %v431 = vadd.f32 %v429, %v430
        %v432 = vrot.slane %v431, 1
        %v433 = vadd.f32 %v431, %v432
        %v434 = vadd.f32 %v392, %v394
        %v435 = vrot.slane %v434, 4
        %v436 = vadd.f32 %v434, %v435
        %v437 = vrot.slane %v436, 2
        %v438 = vadd.f32 %v436, %v437
        %v439 = vrot.slane %v438, 1
        %v440 = vadd.f32 %v438, %v439
        %v441 = vadd.f32 %v395, %v397
        %v442 = vrot.slane %v441, 4
        %v443 = vadd.f32 %v441, %v442
        %v444 = vrot.slane %v443, 2
        %v445 = vadd.f32 %v443, %v444
        %v446 = vrot.slane %v445, 1
        %v447 = vadd.f32 %v445, %v446
        %v448 = vadd.f32 %v396, %v398
        %v449 = vrot.slane %v448, 4
        %v450 = vadd.f32 %v448, %v449
        %v451 = vrot.slane %v450, 2
        %v452 = vadd.f32 %v450, %v451
        %v453 = vrot.slane %v452, 1
        %v454 = vadd.f32 %v452, %v453
        %v455 = vadd.f32 %v405, 1e-05
        %v456 = vadd.f32 %v412, 1e-05
        %v457 = vadd.f32 %v419, 1e-05
        %v458 = vadd.f32 %v426, 1e-05
        %v459 = vadd.f32 %v433, 1e-05
        %v460 = vadd.f32 %v440, 1e-05
        %v461 = vadd.f32 %v447, 1e-05
        %v462 = vadd.f32 %v454, 1e-05
        %v463 = vrcp.pop %v455
        %v464 = vrcp.pop %v456
        %v465 = vrcp.pop %v457
        %v466 = vrcp.pop %v458
        %v467 = vrcp.pop %v459
        %v468 = vrcp.pop %v460
        %v469 = vrcp.pop %v461
        %v470 = vrcp.pop %v462
        %v471 = vmul.f32 %v455, %v463
        %v472 = vmul.f32 %v456, %v464
        %v473 = vmul.f32 %v457, %v465
        %v474 = vmul.f32 %v458, %v466
        %v475 = vmul.f32 %v459, %v467
        %v476 = vmul.f32 %v460, %v468
        %v477 = vmul.f32 %v461, %v469
        %v478 = vmul.f32 %v462, %v470
        %v479 = vsub.f32 2.0, %v471
        %v480 = vsub.f32 2.0, %v472
        %v481 = vsub.f32 2.0, %v473
        %v482 = vsub.f32 2.0, %v474
        %v483 = vsub.f32 2.0, %v475
        %v484 = vsub.f32 2.0, %v476
        %v485 = vsub.f32 2.0, %v477
        %v486 = vsub.f32 2.0, %v478
        %v487 = vmul.f32 %v463, %v479
        %v488 = vmul.f32 %v464, %v480
        %v489 = vmul.f32 %v465, %v481
        %v490 = vmul.f32 %v466, %v482
        %v491 = vmul.f32 %v467, %v483
        %v492 = vmul.f32 %v468, %v484
        %v493 = vmul.f32 %v469, %v485
        %v494 = vmul.f32 %v470, %v486
        %v495 = vmul.f32 %v331, %v487
        %v496 = vmul.f32 %v332, %v488
        %v497 = vmul.f32 %v333, %v487
        %v498 = vmul.f32 %v334, %v488
        %v499 = vmul.f32 %v335, %v489
        %v500 = vmul.f32 %v336, %v490
        %v501 = vmul.f32 %v337, %v489
        %v502 = vmul.f32 %v338, %v490
        %v503 = vmul.f32 %v339, %v491
        %v504 = vmul.f32 %v340, %v492
        %v505 = vmul.f32 %v341, %v491
        %v506 = vmul.f32 %v342, %v492
        %v507 = vmul.f32 %v343, %v493
        %v508 = vmul.f32 %v344, %v494
        %v509 = vmul.f32 %v345, %v493
        %v510 = vmul.f32 %v346, %v494
        %vm511 = vcmask 130048
        %v513 = vsel %vm511, %v347, 0
        %515 = vmatprep.subr.mxu0 %v496
        %516 = vmatpush1.msra.mxu0 %v495
        %517 = vmatprep.subr.mxu0 %v498
        %518 = vmatpush1.msra.mxu0 %v497
        %519 = vmatprep.subr.mxu0 0.0
        %520 = vmatpush1.msra.mxu0 0.0
        %521 = vmatprep.subr.mxu0 0.0
        %522 = vmatpush1.msra.mxu0 0.0
        %523 = vmatprep.subr.mxu0 0.0
        %524 = vmatpush1.msra.mxu0 0.0
        %525 = vmatprep.subr.mxu0 0.0
        %526 = vmatpush1.msra.mxu0 0.0
        %527 = vmatprep.subr.mxu0 0.0
        %528 = vmatpush1.msra.mxu0 0.0
        %529 = vmatprep.subr.mxu0 0.0
        %530 = vmatpush1.msra.mxu0 0.0
        %531 = vmatprep.subr.mxu0 0.0
        %532 = vmatpush1.msra.mxu0 0.0
        %533 = vmatprep.subr.mxu0 0.0
        %534 = vmatpush1.msra.mxu0 0.0
        %535 = vmatprep.subr.mxu0 0.0
        %536 = vmatpush1.msra.mxu0 0.0
        %537 = vmatprep.subr.mxu0 0.0
        %538 = vmatpush1.msra.mxu0 0.0
        %539 = vmatprep.subr.mxu0 0.0
        %540 = vmatpush1.msra.mxu0 0.0
        %541 = vmatprep.subr.mxu0 0.0
        %542 = vmatpush1.msra.mxu0 0.0
        %543 = vmatprep.subr.mxu0 0.0
        %544 = vmatpush1.msra.mxu0 0.0
        %545 = vmatprep.subr.mxu0 0.0
        %546 = vmatpush1.msra.mxu0 0.0
        %547 = vmatprep.subr.mxu0 0.0
        %548 = vmatpush1.msra.mxu0 0.0
        %549 = vmatprep.subr.mxu0 0.0
        %550 = vmatpush1.msra.mxu0 0.0
        %551 = vmatprep.subr.mxu0 0.0
        %552 = vmatpush1.msra.mxu0 0.0
        %553 = vmatprep.subr.mxu0 0.0
        %554 = vmatpush1.msra.mxu0 0.0
        %555 = vmatprep.subr.mxu0 0.0
        %556 = vmatpush1.msra.mxu0 0.0
        %557 = vmatprep.subr.mxu0 0.0
        %558 = vmatpush1.msra.mxu0 0.0
        %559 = vmatprep.subr.mxu0 0.0
        %560 = vmatpush1.msra.mxu0 0.0
        %561 = vmatprep.subr.mxu0 0.0
        %562 = vmatpush1.msra.mxu0 0.0
        %563 = vmatprep.subr.mxu0 0.0
        %564 = vmatpush1.msra.mxu0 0.0
        %565 = vmatprep.subr.mxu0 0.0
        %566 = vmatpush1.msra.mxu0 0.0
        %567 = vmatprep.subr.mxu0 0.0
        %568 = vmatpush1.msra.mxu0 0.0
        %569 = vmatprep.subr.mxu0 0.0
        %570 = vmatpush1.msra.mxu0 0.0
        %571 = vmatprep.subr.mxu0 0.0
        %572 = vmatpush1.msra.mxu0 0.0
        %573 = vmatprep.subr.mxu0 0.0
        %574 = vmatpush1.msra.mxu0 0.0
        %575 = vmatprep.subr.mxu0 0.0
        %576 = vmatpush1.msra.mxu0 0.0
        %577 = vmatprep.subr.mxu0 0.0
        %578 = vmatpush1.msra.mxu0 0.0
        %579 = vmatprep.mubr.f32.mxu0 0.0
        %580 = vmatmul.mubr.f32.gmra.mrb[0].mxu0 %v513
        %v581 = vpop.f32.mrb[0].mxu0
        %v582 = vadd.f32 0.0, %v581
        %v583 = vpop.f32.mrb[0].mxu0
        %v584 = vadd.f32 0.0, %v583
        %585 = vdwg.mxu0
        %v587 = vsel %vm511, %v348, 0
        %589 = vmatprep.subr.mxu0 %v500
        %590 = vmatpush1.msra.mxu0 %v499
        %591 = vmatprep.subr.mxu0 %v502
        %592 = vmatpush1.msra.mxu0 %v501
        %593 = vmatprep.subr.mxu0 0.0
        %594 = vmatpush1.msra.mxu0 0.0
        %595 = vmatprep.subr.mxu0 0.0
        %596 = vmatpush1.msra.mxu0 0.0
        %597 = vmatprep.subr.mxu0 0.0
        %598 = vmatpush1.msra.mxu0 0.0
        %599 = vmatprep.subr.mxu0 0.0
        %600 = vmatpush1.msra.mxu0 0.0
        %601 = vmatprep.subr.mxu0 0.0
        %602 = vmatpush1.msra.mxu0 0.0
        %603 = vmatprep.subr.mxu0 0.0
        %604 = vmatpush1.msra.mxu0 0.0
        %605 = vmatprep.subr.mxu0 0.0
        %606 = vmatpush1.msra.mxu0 0.0
        %607 = vmatprep.subr.mxu0 0.0
        %608 = vmatpush1.msra.mxu0 0.0
        %609 = vmatprep.subr.mxu0 0.0
        %610 = vmatpush1.msra.mxu0 0.0
        %611 = vmatprep.subr.mxu0 0.0
        %612 = vmatpush1.msra.mxu0 0.0
        %613 = vmatprep.subr.mxu0 0.0
        %614 = vmatpush1.msra.mxu0 0.0
        %615 = vmatprep.subr.mxu0 0.0
        %616 = vmatpush1.msra.mxu0 0.0
        %617 = vmatprep.subr.mxu0 0.0
        %618 = vmatpush1.msra.mxu0 0.0
        %619 = vmatprep.subr.mxu0 0.0
        %620 = vmatpush1.msra.mxu0 0.0
        %621 = vmatprep.subr.mxu0 0.0
        %622 = vmatpush1.msra.mxu0 0.0
        %623 = vmatprep.subr.mxu0 0.0
        %624 = vmatpush1.msra.mxu0 0.0
        %625 = vmatprep.subr.mxu0 0.0
        %626 = vmatpush1.msra.mxu0 0.0
        %627 = vmatprep.subr.mxu0 0.0
        %628 = vmatpush1.msra.mxu0 0.0
        %629 = vmatprep.subr.mxu0 0.0
        %630 = vmatpush1.msra.mxu0 0.0
        %631 = vmatprep.subr.mxu0 0.0
        %632 = vmatpush1.msra.mxu0 0.0
        %633 = vmatprep.subr.mxu0 0.0
        %634 = vmatpush1.msra.mxu0 0.0
        %635 = vmatprep.subr.mxu0 0.0
        %636 = vmatpush1.msra.mxu0 0.0
        %637 = vmatprep.subr.mxu0 0.0
        %638 = vmatpush1.msra.mxu0 0.0
        %639 = vmatprep.subr.mxu0 0.0
        %640 = vmatpush1.msra.mxu0 0.0
        %641 = vmatprep.subr.mxu0 0.0
        %642 = vmatpush1.msra.mxu0 0.0
        %643 = vmatprep.subr.mxu0 0.0
        %644 = vmatpush1.msra.mxu0 0.0
        %645 = vmatprep.subr.mxu0 0.0
        %646 = vmatpush1.msra.mxu0 0.0
        %647 = vmatprep.subr.mxu0 0.0
        %648 = vmatpush1.msra.mxu0 0.0
        %649 = vmatprep.subr.mxu0 0.0
        %650 = vmatpush1.msra.mxu0 0.0
        %651 = vmatprep.subr.mxu0 0.0
        %652 = vmatpush1.msra.mxu0 0.0
        %653 = vmatprep.mubr.f32.mxu0 0.0
        %654 = vmatmul.mubr.f32.gmra.mrb[0].mxu0 %v587
        %v655 = vpop.f32.mrb[0].mxu0
        %v656 = vadd.f32 0.0, %v655
        %v657 = vpop.f32.mrb[0].mxu0
        %v658 = vadd.f32 0.0, %v657
        %659 = vdwg.mxu0
        %v661 = vsel %vm511, %v349, 0
        %663 = vmatprep.subr.mxu0 %v504
        %664 = vmatpush1.msra.mxu0 %v503
        %665 = vmatprep.subr.mxu0 %v506
        %666 = vmatpush1.msra.mxu0 %v505
        %667 = vmatprep.subr.mxu0 0.0
        %668 = vmatpush1.msra.mxu0 0.0
        %669 = vmatprep.subr.mxu0 0.0
        %670 = vmatpush1.msra.mxu0 0.0
        %671 = vmatprep.subr.mxu0 0.0
        %672 = vmatpush1.msra.mxu0 0.0
        %673 = vmatprep.subr.mxu0 0.0
        %674 = vmatpush1.msra.mxu0 0.0
        %675 = vmatprep.subr.mxu0 0.0
        %676 = vmatpush1.msra.mxu0 0.0
        %677 = vmatprep.subr.mxu0 0.0
        %678 = vmatpush1.msra.mxu0 0.0
        %679 = vmatprep.subr.mxu0 0.0
        %680 = vmatpush1.msra.mxu0 0.0
        %681 = vmatprep.subr.mxu0 0.0
        %682 = vmatpush1.msra.mxu0 0.0
        %683 = vmatprep.subr.mxu0 0.0
        %684 = vmatpush1.msra.mxu0 0.0
        %685 = vmatprep.subr.mxu0 0.0
        %686 = vmatpush1.msra.mxu0 0.0
        %687 = vmatprep.subr.mxu0 0.0
        %688 = vmatpush1.msra.mxu0 0.0
        %689 = vmatprep.subr.mxu0 0.0
        %690 = vmatpush1.msra.mxu0 0.0
        %691 = vmatprep.subr.mxu0 0.0
        %692 = vmatpush1.msra.mxu0 0.0
        %693 = vmatprep.subr.mxu0 0.0
        %694 = vmatpush1.msra.mxu0 0.0
        %695 = vmatprep.subr.mxu0 0.0
        %696 = vmatpush1.msra.mxu0 0.0
        %697 = vmatprep.subr.mxu0 0.0
        %698 = vmatpush1.msra.mxu0 0.0
        %699 = vmatprep.subr.mxu0 0.0
        %700 = vmatpush1.msra.mxu0 0.0
        %701 = vmatprep.subr.mxu0 0.0
        %702 = vmatpush1.msra.mxu0 0.0
        %703 = vmatprep.subr.mxu0 0.0
        %704 = vmatpush1.msra.mxu0 0.0
        %705 = vmatprep.subr.mxu0 0.0
        %706 = vmatpush1.msra.mxu0 0.0
        %707 = vmatprep.subr.mxu0 0.0
        %708 = vmatpush1.msra.mxu0 0.0
        %709 = vmatprep.subr.mxu0 0.0
        %710 = vmatpush1.msra.mxu0 0.0
        %711 = vmatprep.subr.mxu0 0.0
        %712 = vmatpush1.msra.mxu0 0.0
        %713 = vmatprep.subr.mxu0 0.0
        %714 = vmatpush1.msra.mxu0 0.0
        %715 = vmatprep.subr.mxu0 0.0
        %716 = vmatpush1.msra.mxu0 0.0
        %717 = vmatprep.subr.mxu0 0.0
        %718 = vmatpush1.msra.mxu0 0.0
        %719 = vmatprep.subr.mxu0 0.0
        %720 = vmatpush1.msra.mxu0 0.0
        %721 = vmatprep.subr.mxu0 0.0
        %722 = vmatpush1.msra.mxu0 0.0
        %723 = vmatprep.subr.mxu0 0.0
        %724 = vmatpush1.msra.mxu0 0.0
        %725 = vmatprep.subr.mxu0 0.0
        %726 = vmatpush1.msra.mxu0 0.0
        %727 = vmatprep.mubr.f32.mxu0 0.0
        %728 = vmatmul.mubr.f32.gmra.mrb[0].mxu0 %v661
        %v729 = vpop.f32.mrb[0].mxu0
        %v730 = vadd.f32 0.0, %v729
        %v731 = vpop.f32.mrb[0].mxu0
        %v732 = vadd.f32 0.0, %v731
        %733 = vdwg.mxu0
        %v735 = vsel %vm511, %v350, 0
        %737 = vmatprep.subr.mxu0 %v508
        %738 = vmatpush1.msra.mxu0 %v507
        %739 = vmatprep.subr.mxu0 %v510
        %740 = vmatpush1.msra.mxu0 %v509
        %741 = vmatprep.subr.mxu0 0.0
        %742 = vmatpush1.msra.mxu0 0.0
        %743 = vmatprep.subr.mxu0 0.0
        %744 = vmatpush1.msra.mxu0 0.0
        %745 = vmatprep.subr.mxu0 0.0
        %746 = vmatpush1.msra.mxu0 0.0
        %747 = vmatprep.subr.mxu0 0.0
        %748 = vmatpush1.msra.mxu0 0.0
        %749 = vmatprep.subr.mxu0 0.0
        %750 = vmatpush1.msra.mxu0 0.0
        %751 = vmatprep.subr.mxu0 0.0
        %752 = vmatpush1.msra.mxu0 0.0
        %753 = vmatprep.subr.mxu0 0.0
        %754 = vmatpush1.msra.mxu0 0.0
        %755 = vmatprep.subr.mxu0 0.0
        %756 = vmatpush1.msra.mxu0 0.0
        %757 = vmatprep.subr.mxu0 0.0
        %758 = vmatpush1.msra.mxu0 0.0
        %759 = vmatprep.subr.mxu0 0.0
        %760 = vmatpush1.msra.mxu0 0.0
        %761 = vmatprep.subr.mxu0 0.0
        %762 = vmatpush1.msra.mxu0 0.0
        %763 = vmatprep.subr.mxu0 0.0
        %764 = vmatpush1.msra.mxu0 0.0
        %765 = vmatprep.subr.mxu0 0.0
        %766 = vmatpush1.msra.mxu0 0.0
        %767 = vmatprep.subr.mxu0 0.0
        %768 = vmatpush1.msra.mxu0 0.0
        %769 = vmatprep.subr.mxu0 0.0
        %770 = vmatpush1.msra.mxu0 0.0
        %771 = vmatprep.subr.mxu0 0.0
        %772 = vmatpush1.msra.mxu0 0.0
        %773 = vmatprep.subr.mxu0 0.0
        %774 = vmatpush1.msra.mxu0 0.0
        %775 = vmatprep.subr.mxu0 0.0
        %776 = vmatpush1.msra.mxu0 0.0
        %777 = vmatprep.subr.mxu0 0.0
        %778 = vmatpush1.msra.mxu0 0.0
        %779 = vmatprep.subr.mxu0 0.0
        %780 = vmatpush1.msra.mxu0 0.0
        %781 = vmatprep.subr.mxu0 0.0
        %782 = vmatpush1.msra.mxu0 0.0
        %783 = vmatprep.subr.mxu0 0.0
        %784 = vmatpush1.msra.mxu0 0.0
        %785 = vmatprep.subr.mxu0 0.0
        %786 = vmatpush1.msra.mxu0 0.0
        %787 = vmatprep.subr.mxu0 0.0
        %788 = vmatpush1.msra.mxu0 0.0
        %789 = vmatprep.subr.mxu0 0.0
        %790 = vmatpush1.msra.mxu0 0.0
        %791 = vmatprep.subr.mxu0 0.0
        %792 = vmatpush1.msra.mxu0 0.0
        %793 = vmatprep.subr.mxu0 0.0
        %794 = vmatpush1.msra.mxu0 0.0
        %795 = vmatprep.subr.mxu0 0.0
        %796 = vmatpush1.msra.mxu0 0.0
        %797 = vmatprep.subr.mxu0 0.0
        %798 = vmatpush1.msra.mxu0 0.0
        %799 = vmatprep.subr.mxu0 0.0
        %800 = vmatpush1.msra.mxu0 0.0
        %801 = vmatprep.mubr.f32.mxu0 0.0
        %802 = vmatmul.mubr.f32.gmra.mrb[0].mxu0 %v735
        %v803 = vpop.f32.mrb[0].mxu0
        %v804 = vadd.f32 0.0, %v803
        %v805 = vpop.f32.mrb[0].mxu0
        %v806 = vadd.f32 0.0, %v805
        %807 = vdwg.mxu0
        %v812 = vcombine.high %v327, %v327
        %v813 = vcombine.high %v328, %v328
        %v814 = vcombine.high %v329, %v329
        %v815 = vcombine.high %v330, %v330
        %v820 = vmul.f32 %v582, %v327
        %v821 = vmul.f32 %v584, %v812
        %v822 = vmul.f32 %v656, %v328
        %v823 = vmul.f32 %v658, %v813
        %v824 = vmul.f32 %v730, %v329
        %v825 = vmul.f32 %v732, %v814
        %v826 = vmul.f32 %v804, %v330
        %v827 = vmul.f32 %v806, %v815
        %v828 = vadd.f32 %v820, %v327
        %v829 = vadd.f32 %v821, %v812
        %v830 = vadd.f32 %v822, %v328
        %v831 = vadd.f32 %v823, %v813
        %v832 = vadd.f32 %v824, %v329
        %v833 = vadd.f32 %v825, %v814
        %v834 = vadd.f32 %v826, %v330
        %v835 = vadd.f32 %v827, %v815
        %v844 = vcombine.low %v828, %v829
        %v845 = vcombine.low %v830, %v831
        %v846 = vcombine.low %v832, %v833
        %v847 = vcombine.low %v834, %v835
        %852 = vst [vmem:[%s318] sm:$0xff] %v844
        %853 = vst [vmem:[%s318 + $0x8] sm:$0xff] %v845
        %854 = vst [vmem:[%s318 + $0x10] sm:$0xff] %v846
        %855 = vst [vmem:[%s318 + $0x18] sm:$0xff] %v847
        %s856 = sand.u32 %s118, 1
        %s857 = sand.u32 %s118, 1
        %s858 = smul.addr %s857, 32
        %s859 = scalar_lea.vmem [#allocation4], %s858
        // Predicated region
        $region94: #{decoder_forward.3} parent=84 // pred_check
          %p860 = pneg %p128
        $region95: #{decoder_forward.3} parent=84 // pred_check_branch
          %862 = sbr.rel (%p860) target = $region97
        $region96: #{decoder_forward.3} parent=84 // pred_region
          %s863 = smul.u32 2, %s19
          %s864 = smul.addr %s18, 32
          %s865 = sadd.s32 %s863, %s864
          %s866 = smul.addr %s865, 4
          %s867 = scalar_lea.vmem %s3, %s866
          // Predicated region
          $region98: #{decoder_forward.3} parent=96 // pred_check
            _
          $region99: #{decoder_forward.3} parent=96 // pred_check_branch
            %869 = sbr.rel (0) target = $region101
          $region100: #{decoder_forward.3} parent=96 // pred_region
            // Predicated region
            $region102: #{decoder_forward.3} parent=100 // pred_check
              _
            $region103: #{decoder_forward.3} parent=100 // pred_check_branch
              %871 = sbr.rel (0) target = $region105
            $region104: #{decoder_forward.3} parent=100 // pred_region
              // Predicated region
              $region117: #{decoder_forward.3} parent=104 // pred_check
                _
              $region118: #{decoder_forward.3} parent=104 // pred_check_branch
                %892 = sbr.rel (0) target = $region120
              $region119: #{decoder_forward.3} parent=104 // pred_region
                loop: start=0, step=1, limit=1
                $region121: #{decoder_forward.3} parent=119 // loop_pre_header
                  _
                $region122: #{decoder_forward.3} parent=119 // loop_header
                  %s894 = sphi 0, %s898
                  %p895 = scmp.ge.s32.totalorder %s894, 1
                  %s899 = sphi %s859, %s859
                  %s900 = sphi %s867, %s867
                $region123: #{decoder_forward.3} parent=119 // loop_header_branch
                  %897 = sbr.rel (%p895) target = $region127
                $region124: #{decoder_forward.3} parent=119 // loop_body
                  %v901 = vld [vmem:[%s899] sm:$0xff]
                  %902 = vst [vmem:[%s900] sm:$0xff] %v901
                  %v903 = vld [vmem:[%s899 + $0x8] sm:$0xff]
                  %904 = vst [vmem:[%s900 + $0x20] sm:$0xff] %v903
                  %v905 = vld [vmem:[%s899 + $0x10] sm:$0xff]
                  %906 = vst [vmem:[%s900 + $0x40] sm:$0xff] %v905
                  %v907 = vld [vmem:[%s899 + $0x18] sm:$0xff]
                  %908 = vst [vmem:[%s900 + $0x60] sm:$0xff] %v907
                $region125: #{decoder_forward.3} parent=119 // loop_footer
                  %s898 = sadd.s32 1, %s894
                $region126: #{decoder_forward.3} parent=119 // loop_footer_branch
                  %893 = sbr.rel target = $region122
                $region127: #{decoder_forward.3} parent=119 // loop_exit
                  _
              $region120: #{decoder_forward.3} parent=104 // pred_fallthru
                _
              // Predicated region
              $region128: #{decoder_forward.3} parent=104 // pred_check
                _
              $region129: #{decoder_forward.3} parent=104 // pred_check_branch
                %910 = sbr.rel target = $region131
              $region130: #{decoder_forward.3} parent=104 // pred_region
                _
              $region131: #{decoder_forward.3} parent=104 // pred_fallthru
                _
            $region105: #{decoder_forward.3} parent=100 // pred_fallthru
              _
            // Predicated region
            $region106: #{decoder_forward.3} parent=100 // pred_check
              _
            $region107: #{decoder_forward.3} parent=100 // pred_check_branch
              %873 = sbr.rel target = $region109
            $region108: #{decoder_forward.3} parent=100 // pred_region
              loop: start=0, step=1, limit=1
              $region110: #{decoder_forward.3} parent=108 // loop_pre_header
                _
              $region111: #{decoder_forward.3} parent=108 // loop_header
                %s876 = sphi 0, %s880
                %p877 = scmp.ge.s32.totalorder %s876, 1
                %s881 = sphi %s859, %s859
                %s882 = sphi %s867, %s867
              $region112: #{decoder_forward.3} parent=108 // loop_header_branch
                %879 = sbr.rel (%p877) target = $region116
              $region113: #{decoder_forward.3} parent=108 // loop_body
                %v883 = vld [vmem:[%s881] sm:$0xff]
                %884 = vst [vmem:[%s882] sm:$0xff] %v883
                %v885 = vld [vmem:[%s881 + $0x8] sm:$0xff]
                %886 = vst [vmem:[%s882 + $0x20] sm:$0xff] %v885
                %v887 = vld [vmem:[%s881 + $0x10] sm:$0xff]
                %888 = vst [vmem:[%s882 + $0x40] sm:$0xff] %v887
                %v889 = vld [vmem:[%s881 + $0x18] sm:$0xff]
                %890 = vst [vmem:[%s882 + $0x60] sm:$0xff] %v889
              $region114: #{decoder_forward.3} parent=108 // loop_footer
                %s880 = sadd.s32 1, %s876
              $region115: #{decoder_forward.3} parent=108 // loop_footer_branch
                %875 = sbr.rel target = $region111
              $region116: #{decoder_forward.3} parent=108 // loop_exit
                _
            $region109: #{decoder_forward.3} parent=100 // pred_fallthru
              _
          $region101: #{decoder_forward.3} parent=96 // pred_fallthru
            _
          %911 = vnop
        $region97: #{decoder_forward.3} parent=84 // pred_fallthru
          _
      $region85: #{decoder_forward.3} parent=5 // pred_fallthru
        _
      %p912 = scmp.le.s32.totalorder 2, %s9
      // Predicated region
      $region132: #{decoder_forward.3} parent=5 // pred_check
        %p913 = pneg %p912
      $region133: #{decoder_forward.3} parent=5 // pred_check_branch
        %915 = sbr.rel (%p913) target = $region135
      $region134: #{decoder_forward.3} parent=5 // pred_region
        %s916 = ssub.s32 %s9, 2
        // Predicated region
        $region136: #{decoder_forward.3} parent=134 // pred_check
          %p917 = pneg %p134
        $region137: #{decoder_forward.3} parent=134 // pred_check_branch
          %919 = sbr.rel (%p917) target = $region139
        $region138: #{decoder_forward.3} parent=134 // pred_region
          %s920 = sand.u32 %s119, 1
          %s921 = sand.u32 %s119, 1
          %s922 = smul.addr %s921, 32
          %s923 = scalar_lea.vmem [#allocation4], %s922
        $region139: #{decoder_forward.3} parent=134 // pred_fallthru
          _
      $region135: #{decoder_forward.3} parent=5 // pred_fallthru
        _
    $region6: #{decoder_forward.3} parent=1 // loop_footer
      %s13 = sadd.s32 1, %s9
    $region7: #{decoder_forward.3} parent=1 // loop_footer_branch
      %8 = sbr.rel target = $region3
    $region8: #{decoder_forward.3} parent=1 // loop_exit
      _

// kernel: decoder_forward.2
$region0: #{decoder_forward.2}
  #allocation0 [shape = 'u32[]', space=smem, size = 0x4, offset = 0x4, fixed_abs, tag = 'smem constant byte address 0x4 - core index']
  #allocation1 [shape = 'u32[144,128]{1,0:T(1,128)}', space=vmem, size = 0x12000, scoped, tag = 'internal scratch']
  %s0 = inlined_call_operand.vmem [shape: f32[2,4,4,1024], index: 0, kind: input, shape index: {}]
  %s1 = inlined_call_operand.vmem [shape: s32[1024,1], index: 1, kind: input, shape index: {}]
  %s2 = inlined_call_operand.vmem [shape: f32[2,4,4,64], index: 2, kind: output, shape index: {}]
  %s3 = sld [smem:[#allocation0]]
  $region79: #{decoder_forward.2} parent=0
    _
  %s5 = ssub.s32 1, %s3
  %s6 = scalar_select 0, %s5, %s3
  $region1: #{decoder_forward.2} parent=0
    #allocation2 [shape = 'u8[32768]{0}', space=vmem, size = 0x8000, scoped, tag = 'input window, operand 0']
    loop: start=0, step=1, limit=10
    $region2: #{decoder_forward.2} parent=1 // loop_pre_header
      _
    $region3: #{decoder_forward.2} parent=1 // loop_header
      %s8 = sphi 0, %s12
      %p9 = scmp.ge.s32.totalorder %s8, 10
      %s15 = sphi 0, %s27
      %s16 = sphi 0, %s23
      %s17 = sphi 0, %s15
      %s18 = sphi 0, %s16
      %s19 = sphi 0, %s17
      %s20 = sphi 0, %s18
      %s32 = sphi 0, %s34
      %s35 = sphi 0, %s32
      %s36 = sphi 0, %s35
      %s52 = sphi 0, %s36
      %s58 = sphi 0, %s60
      %s61 = sphi 0, %s58
      %s62 = sphi 0, %s61
      %s78 = sphi 0, %s62
      %s86 = sphi 0, %s88
      %s89 = sphi 0, %s86
      %s90 = sphi 0, %s89
      %s106 = sphi 0, %s90
    $region4: #{decoder_forward.2} parent=1 // loop_header_branch
      %11 = sbr.rel (%p9) target = $region8
    $region5: #{decoder_forward.2} parent=1 // loop_body
      %s13 = ssub.s32 %s8, 1
      %s14 = ssub.s32 %s8, 2
      %s21 = sadd.s32 1, %s16
      %p22 = scmp.ge.s32.totalorder %s21, 4
      %s23 = scalar_select %p22, 0, %s21
      %s24 = sadd.s32 1, %s15
      %s25 = scalar_select %p22, %s24, %s15
      %p26 = scmp.ge.s32.totalorder %s25, 2
      %s27 = scalar_select %p26, 0, %s25
      %s28 = ssub.s32 %s15, %s27
      %s29 = ssub.s32 %s16, %s23
      %s30 = sor.u32 %s28, %s29
      %p31 = scmp.eq.s32.totalorder %s30, 0
      %s33 = sadd.s32 %s32, 1
      %s34 = scalar_select %p31, %s32, %s33
      %p37 = pneg %p31
      %p38 = scmp.eq.s32.totalorder %s8, 7
      %p39 = por %p37, %p38
      %p40 = scmp.ne.s32.totalorder %s32, %s35
      %p41 = scmp.eq.s32.totalorder %s8, 0
      %p42 = por %p40, %p41
      %p43 = scmp.ne.s32.totalorder %s32, %s35
      %p44 = scmp.eq.s32.totalorder %s13, 7
      %p45 = por %p43, %p44
      %p46 = scmp.ne.s32.totalorder %s35, %s36
      %p47 = scmp.eq.s32.totalorder %s13, 0
      %p48 = por %p46, %p47
      %p49 = scmp.ne.s32.totalorder %s35, %s36
      %p50 = scmp.eq.s32.totalorder %s14, 7
      %p51 = por %p49, %p50
      %p53 = scmp.ne.s32.totalorder %s36, %s52
      %p54 = scmp.eq.s32.totalorder %s14, 0
      %p55 = por %p53, %p54
      %s56 = ssub.s32 %s16, %s23
      %p57 = scmp.eq.s32.totalorder %s56, 0
      %s59 = sadd.s32 %s58, 1
      %s60 = scalar_select %p57, %s58, %s59
      %p63 = pneg %p57
      %p64 = scmp.eq.s32.totalorder %s8, 7
      %p65 = por %p63, %p64
      %p66 = scmp.ne.s32.totalorder %s58, %s61
      %p67 = scmp.eq.s32.totalorder %s8, 0
      %p68 = por %p66, %p67
      %p69 = scmp.ne.s32.totalorder %s58, %s61
      %p70 = scmp.eq.s32.totalorder %s13, 7
      %p71 = por %p69, %p70
      %p72 = scmp.ne.s32.totalorder %s61, %s62
      %p73 = scmp.eq.s32.totalorder %s13, 0
      %p74 = por %p72, %p73
      %p75 = scmp.ne.s32.totalorder %s61, %s62
      %p76 = scmp.eq.s32.totalorder %s14, 7
      %p77 = por %p75, %p76
      %p79 = scmp.ne.s32.totalorder %s62, %s78
      %p80 = scmp.eq.s32.totalorder %s14, 0
      %p81 = por %p79, %p80
      %s82 = ssub.s32 %s15, %s27
      %s83 = ssub.s32 %s16, %s23
      %s84 = sor.u32 %s82, %s83
      %p85 = scmp.eq.s32.totalorder %s84, 0
      %s87 = sadd.s32 %s86, 1
      %s88 = scalar_select %p85, %s86, %s87
      %p91 = pneg %p85
      %p92 = scmp.eq.s32.totalorder %s8, 7
      %p93 = por %p91, %p92
      %p94 = scmp.ne.s32.totalorder %s86, %s89
      %p95 = scmp.eq.s32.totalorder %s8, 0
      %p96 = por %p94, %p95
      %p97 = scmp.ne.s32.totalorder %s86, %s89
      %p98 = scmp.eq.s32.totalorder %s13, 7
      %p99 = por %p97, %p98
      %p100 = scmp.ne.s32.totalorder %s89, %s90
      %p101 = scmp.eq.s32.totalorder %s13, 0
      %p102 = por %p100, %p101
      %p103 = scmp.ne.s32.totalorder %s89, %s90
      %p104 = scmp.eq.s32.totalorder %s14, 7
      %p105 = por %p103, %p104
      %p107 = scmp.ne.s32.totalorder %s90, %s106
      %p108 = scmp.eq.s32.totalorder %s14, 0
      %p109 = por %p107, %p108
      %p110 = scmp.le.s32.totalorder 1, %s8
      %p111 = scmp.lt.s32.totalorder %s8, 9
      %p112 = pnand %p110, %p111
      %p113 = pneg %p112
      // Predicated region
      $region9: #{decoder_forward.2} parent=5 // pred_check
        _
      $region10: #{decoder_forward.2} parent=5 // pred_check_branch
        %115 = sbr.rel (%p112) target = $region12
      $region11: #{decoder_forward.2} parent=5 // pred_region
        %s116 = ssub.s32 %s8, 1
      $region12: #{decoder_forward.2} parent=5 // pred_fallthru
        _
      %p117 = scmp.lt.s32.totalorder %s8, 8
      // Predicated region
      $region13: #{decoder_forward.2} parent=5 // pred_check
        %p118 = pneg %p117
      $region14: #{decoder_forward.2} parent=5 // pred_check_branch
        %120 = sbr.rel (%p118) target = $region16
      $region15: #{decoder_forward.2} parent=5 // pred_region
        // Predicated region
        $region17: #{decoder_forward.2} parent=15 // pred_check
          %p121 = pneg %p42
        $region18: #{decoder_forward.2} parent=15 // pred_check_branch
          %123 = sbr.rel (%p121) target = $region20
        $region19: #{decoder_forward.2} parent=15 // pred_region
          %s124 = sand.u32 %s32, 1
          %s125 = sand.u32 %s32, 1
          %s126 = smul.addr %s125, 32
          %s127 = scalar_lea.vmem [#allocation2], %s126
          %s128 = smul.u32 2, %s16
          %s129 = smul.addr %s15, 32
          %s130 = sadd.s32 %s128, %s129
          %s131 = smul.addr %s130, 4
          %s132 = scalar_lea.vmem %s0, %s131
          // Predicated region
          $region21: #{decoder_forward.2} parent=19 // pred_check
            _
          $region22: #{decoder_forward.2} parent=19 // pred_check_branch
            %134 = sbr.rel (0) target = $region24
          $region23: #{decoder_forward.2} parent=19 // pred_region
            // Predicated region
            $region25: #{decoder_forward.2} parent=23 // pred_check
              _
            $region26: #{decoder_forward.2} parent=23 // pred_check_branch
              %136 = sbr.rel (0) target = $region28
            $region27: #{decoder_forward.2} parent=23 // pred_region
              // Predicated region
              $region40: #{decoder_forward.2} parent=27 // pred_check
                _
              $region41: #{decoder_forward.2} parent=27 // pred_check_branch
                %157 = sbr.rel (0) target = $region43
              $region42: #{decoder_forward.2} parent=27 // pred_region
                loop: start=0, step=1, limit=1
                $region44: #{decoder_forward.2} parent=42 // loop_pre_header
                  _
                $region45: #{decoder_forward.2} parent=42 // loop_header
                  %s159 = sphi 0, %s163
                  %p160 = scmp.ge.s32.totalorder %s159, 1
                  %s164 = sphi %s132, %s132
                  %s165 = sphi %s127, %s127
                $region46: #{decoder_forward.2} parent=42 // loop_header_branch
                  %162 = sbr.rel (%p160) target = $region50
                $region47: #{decoder_forward.2} parent=42 // loop_body
                  %v166 = vld [vmem:[%s164] sm:$0xff]
                  %167 = vst [vmem:[%s165] sm:$0xff] %v166
                  %v168 = vld [vmem:[%s164 + $0x20] sm:$0xff]
                  %169 = vst [vmem:[%s165 + $0x8] sm:$0xff] %v168
                  %v170 = vld [vmem:[%s164 + $0x40] sm:$0xff]
                  %171 = vst [vmem:[%s165 + $0x10] sm:$0xff] %v170
                  %v172 = vld [vmem:[%s164 + $0x60] sm:$0xff]
                  %173 = vst [vmem:[%s165 + $0x18] sm:$0xff] %v172
                $region48: #{decoder_forward.2} parent=42 // loop_footer
                  %s163 = sadd.s32 1, %s159
                $region49: #{decoder_forward.2} parent=42 // loop_footer_branch
                  %158 = sbr.rel target = $region45
                $region50: #{decoder_forward.2} parent=42 // loop_exit
                  _
              $region43: #{decoder_forward.2} parent=27 // pred_fallthru
                _
              // Predicated region
              $region51: #{decoder_forward.2} parent=27 // pred_check
                _
              $region52: #{decoder_forward.2} parent=27 // pred_check_branch
                %175 = sbr.rel target = $region54
              $region53: #{decoder_forward.2} parent=27 // pred_region
                _
              $region54: #{decoder_forward.2} parent=27 // pred_fallthru
                _
            $region28: #{decoder_forward.2} parent=23 // pred_fallthru
              _
            // Predicated region
            $region29: #{decoder_forward.2} parent=23 // pred_check
              _
            $region30: #{decoder_forward.2} parent=23 // pred_check_branch
              %138 = sbr.rel target = $region32
            $region31: #{decoder_forward.2} parent=23 // pred_region
              loop: start=0, step=1, limit=1
              $region33: #{decoder_forward.2} parent=31 // loop_pre_header
                _
              $region34: #{decoder_forward.2} parent=31 // loop_header
                %s141 = sphi 0, %s145
                %p142 = scmp.ge.s32.totalorder %s141, 1
                %s146 = sphi %s132, %s132
                %s147 = sphi %s127, %s127
              $region35: #{decoder_forward.2} parent=31 // loop_header_branch
                %144 = sbr.rel (%p142) target = $region39
              $region36: #{decoder_forward.2} parent=31 // loop_body
                %v148 = vld [vmem:[%s146] sm:$0xff]
                %149 = vst [vmem:[%s147] sm:$0xff] %v148
                %v150 = vld [vmem:[%s146 + $0x20] sm:$0xff]
                %151 = vst [vmem:[%s147 + $0x8] sm:$0xff] %v150
                %v152 = vld [vmem:[%s146 + $0x40] sm:$0xff]
                %153 = vst [vmem:[%s147 + $0x10] sm:$0xff] %v152
                %v154 = vld [vmem:[%s146 + $0x60] sm:$0xff]
                %155 = vst [vmem:[%s147 + $0x18] sm:$0xff] %v154
              $region37: #{decoder_forward.2} parent=31 // loop_footer
                %s145 = sadd.s32 1, %s141
              $region38: #{decoder_forward.2} parent=31 // loop_footer_branch
                %140 = sbr.rel target = $region34
              $region39: #{decoder_forward.2} parent=31 // loop_exit
                _
            $region32: #{decoder_forward.2} parent=23 // pred_fallthru
              _
          $region24: #{decoder_forward.2} parent=19 // pred_fallthru
            _
          %176 = vnop
        $region20: #{decoder_forward.2} parent=15 // pred_fallthru
          _
        // Predicated region
        $region55: #{decoder_forward.2} parent=15 // pred_check
          %p177 = pneg %p68
        $region56: #{decoder_forward.2} parent=15 // pred_check_branch
          %179 = sbr.rel (%p177) target = $region58
        $region57: #{decoder_forward.2} parent=15 // pred_region
          %s180 = smul.u32 32, %s16
          %p181 = scmp.lt.s32.totalorder %s180, 127
          %s182 = scalar_select %p181, %s180, 127
          %s183 = smul.addr %s182, 8
          %s184 = scalar_lea.vmem %s1, %s183
          %s185 = smul.u32 32, %s16
        $region58: #{decoder_forward.2} parent=15 // pred_fallthru
          _
      $region16: #{decoder_forward.2} parent=5 // pred_fallthru
        _
      %p186 = scmp.le.s32.totalorder 1, %s8
      %p187 = scmp.lt.s32.totalorder %s8, 9
      %p188 = pnand %p186, %p187
      %p189 = pneg %p188
      // Predicated region
      $region59: #{decoder_forward.2} parent=5 // pred_check
        _
      $region60: #{decoder_forward.2} parent=5 // pred_check_branch
        %191 = sbr.rel (%p188) target = $region62
      $region61: #{decoder_forward.2} parent=5 // pred_region
        %s192 = ssub.s32 %s8, 1
        %s193 = sand.u32 %s35, 1
        %s194 = sand.u32 %s35, 1
        %s195 = smul.addr %s194, 32
        %s196 = scalar_lea.vmem [#allocation2], %s195
        // Predicated region
        $region63: #{decoder_forward.2} parent=61 // pred_check
          %p197 = pneg %p48
        $region64: #{decoder_forward.2} parent=61 // pred_check_branch
          %199 = sbr.rel (%p197) target = $region66
        $region65: #{decoder_forward.2} parent=61 // pred_region
          _
        $region66: #{decoder_forward.2} parent=61 // pred_fallthru
          _
        %s200 = sand.u32 %s35, 1
        %s201 = sand.u32 %s35, 1
        %s202 = smul.addr %s201, 32
        %s203 = scalar_lea.vmem [#allocation2], %s202
        %p204 = pneg %p48
        %p205 = pneg %p45
        %s206 = smul.u32 32, %s18
        %p207 = scmp.lt.s32.totalorder %s206, 127
        %s208 = scalar_select %p207, %s206, 127
        %s209 = smul.addr %s208, 8
        %s210 = scalar_lea.vmem %s1, %s209
        %p211 = pneg %p74
        %p212 = pneg %p71
        %p213 = pneg %p102
        %p214 = pneg %p99
        %p215 = scmp.lt.s32.totalorder %s17, 1
        %s216 = scalar_select %p215, %s17, 1
        %p217 = scmp.lt.s32.totalorder %s18, 3
        %s218 = scalar_select %p217, %s18, 3
        %s219 = smul.addr %s216, 4
        %s220 = sadd.s32 %s218, %s219
        %s221 = smul.addr %s220, 4
        %s222 = scalar_lea.vmem %s2, %s221
        %s223 = smul.u32 2, %s18
        %s224 = smul.u32 32, %s18
        %p225 = scmp.lt.s32.totalorder %s224, 127
        %s226 = scalar_select %p225, %s224, 127
        %s227 = smul.addr %s226, 8
        %s228 = scalar_lea.vmem %s1, %s227
        %s229 = smul.u32 32, %s18
        %p230 = scmp.lt.s32.totalorder %s17, 1
        %s231 = scalar_select %p230, %s17, 1
        %p232 = scmp.lt.s32.totalorder %s18, 3
        %s233 = scalar_select %p232, %s18, 3
        %s234 = smul.addr %s231, 4
        %s235 = sadd.s32 %s233, %s234
        %s236 = smul.addr %s235, 4
        %s237 = scalar_lea.vmem %s2, %s236
        %v238 = vld [vmem:[%s196] sm:$0xff]
        %v239 = vld [vmem:[%s196 + $0x8] sm:$0xff]
        %v240 = vld [vmem:[%s196 + $0x10] sm:$0xff]
        %v241 = vld [vmem:[%s196 + $0x18] sm:$0xff]
        %v242 = vmax.f32 %v238, %v239
        %v243 = vmax.f32 %v240, %v241
        %v244 = vmax.f32 %v242, %v243
        %v245 = vsub.f32 %v238, %v244
        %v246 = vsub.f32 %v239, %v244
        %v247 = vsub.f32 %v240, %v244
        %v248 = vsub.f32 %v241, %v244
        %v249 = vmul.f32 %v245, 1.442695
        %v250 = vpow.pop %v249
        %v251 = vmul.f32 %v246, 1.442695
        %v252 = vpow.pop %v251
        %v253 = vmul.f32 %v247, 1.442695
        %v254 = vpow.pop %v253
        %v255 = vmul.f32 %v248, 1.442695
        %v256 = vpow.pop %v255
        %v261 = vcombine.high %v250, %v250
        %v262 = vcombine.high %v252, %v252
        %v263 = vcombine.high %v254, %v254
        %v264 = vcombine.high %v256, %v256
        %vm269 = vcmask 1043456
        %v270 = vsel %vm269, %v250, 0.0
        %v271 = vsel %vm269, %v252, 0.0
        %v272 = vadd.f32 %v270, %v271
        %v273 = vsel %vm269, %v254, 0.0
        %v274 = vadd.f32 %v272, %v273
        %v275 = vsel %vm269, %v256, 0.0
        %v276 = vadd.f32 %v274, %v275
        %v277 = vsel %vm269, %v261, 0.0
        %v278 = vsel %vm269, %v262, 0.0
        %v279 = vadd.f32 %v277, %v278
        %v280 = vsel %vm269, %v263, 0.0
        %v281 = vadd.f32 %v279, %v280
        %v282 = vsel %vm269, %v264, 0.0
        %v283 = vadd.f32 %v281, %v282
        %v284 = vrcp.pop %v276
        %v285 = vrcp.pop %v283
        %v286 = vmul.f32 %v276, %v284
        %v287 = vmul.f32 %v283, %v285
        %v288 = vsub.f32 2.0, %v286
        %v289 = vsub.f32 2.0, %v287
        %v290 = vmul.f32 %v284, %v288
        %v291 = vmul.f32 %v285, %v289
        %v294 = vcombine.low %v290, %v291
        %v296 = vmul.f32 %v250, %v294
        %v297 = vmul.f32 %v252, %v294
        %v298 = vmul.f32 %v254, %v294
        %v299 = vmul.f32 %v256, %v294
        %v304 = vcombine.high %v296, %v296
        %v305 = vcombine.high %v297, %v297
        %v306 = vcombine.high %v298, %v298
        %v307 = vcombine.high %v299, %v299
        %v312 = vsel %vm269, %v296, 0.0
        %v313 = vrot.slane %v312, 4
        %v314 = vadd.f32 %v312, %v313
        %v315 = vrot.slane %v314, 2
        %v316 = vadd.f32 %v314, %v315
        %v317 = vrot.slane %v316, 1
        %v318 = vadd.f32 %v316, %v317
        %v319 = vsel %vm269, %v304, 0.0
        %v320 = vrot.slane %v319, 4
        %v321 = vadd.f32 %v319, %v320
        %v322 = vrot.slane %v321, 2
        %v323 = vadd.f32 %v321, %v322
        %v324 = vrot.slane %v323, 1
        %v325 = vadd.f32 %v323, %v324
        %v326 = vsel %vm269, %v297, 0.0
        %v327 = vrot.slane %v326, 4
        %v328 = vadd.f32 %v326, %v327
        %v329 = vrot.slane %v328, 2
        %v330 = vadd.f32 %v328, %v329
        %v331 = vrot.slane %v330, 1
        %v332 = vadd.f32 %v330, %v331
        %v333 = vsel %vm269, %v305, 0.0
        %v334 = vrot.slane %v333, 4
        %v335 = vadd.f32 %v333, %v334
        %v336 = vrot.slane %v335, 2
        %v337 = vadd.f32 %v335, %v336
        %v338 = vrot.slane %v337, 1
        %v339 = vadd.f32 %v337, %v338
        %v340 = vsel %vm269, %v298, 0.0
        %v341 = vrot.slane %v340, 4
        %v342 = vadd.f32 %v340, %v341
        %v343 = vrot.slane %v342, 2
        %v344 = vadd.f32 %v342, %v343
        %v345 = vrot.slane %v344, 1
        %v346 = vadd.f32 %v344, %v345
        %v347 = vsel %vm269, %v306, 0.0
        %v348 = vrot.slane %v347, 4
        %v349 = vadd.f32 %v347, %v348
        %v350 = vrot.slane %v349, 2
        %v351 = vadd.f32 %v349, %v350
        %v352 = vrot.slane %v351, 1
        %v353 = vadd.f32 %v351, %v352
        %v354 = vsel %vm269, %v299, 0.0
        %v355 = vrot.slane %v354, 4
        %v356 = vadd.f32 %v354, %v355
        %v357 = vrot.slane %v356, 2
        %v358 = vadd.f32 %v356, %v357
        %v359 = vrot.slane %v358, 1
        %v360 = vadd.f32 %v358, %v359
        %v361 = vsel %vm269, %v307, 0.0
        %v362 = vrot.slane %v361, 4
        %v363 = vadd.f32 %v361, %v362
        %v364 = vrot.slane %v363, 2
        %v365 = vadd.f32 %v363, %v364
        %v366 = vrot.slane %v365, 1
        %v367 = vadd.f32 %v365, %v366
        %v368 = vld [vmem:[%s228] sm:$0xff]
        %v369 = vld [vmem:[%s228 + $0x8] sm:$0xff]
        %v370 = vld [vmem:[%s228 + $0x10] sm:$0xff]
        %v371 = vld [vmem:[%s228 + $0x18] sm:$0xff]
        %v372 = vld [vmem:[%s228 + $0x20] sm:$0xff]
        %v373 = vld [vmem:[%s228 + $0x28] sm:$0xff]
        %v374 = vld [vmem:[%s228 + $0x30] sm:$0xff]
        %v375 = vld [vmem:[%s228 + $0x38] sm:$0xff]
        %v376 = vld [vmem:[%s228 + $0x40] sm:$0xff]
        %v377 = vld [vmem:[%s228 + $0x48] sm:$0xff]
        %v378 = vld [vmem:[%s228 + $0x50] sm:$0xff]
        %v379 = vld [vmem:[%s228 + $0x58] sm:$0xff]
        %v380 = vld [vmem:[%s228 + $0x60] sm:$0xff]
        %v381 = vld [vmem:[%s228 + $0x68] sm:$0xff]
        %v382 = vld [vmem:[%s228 + $0x70] sm:$0xff]
        %v383 = vld [vmem:[%s228 + $0x78] sm:$0xff]
        %v384 = vld [vmem:[%s228 + $0x80] sm:$0xff]
        %v385 = vld [vmem:[%s228 + $0x88] sm:$0xff]
        %v386 = vld [vmem:[%s228 + $0x90] sm:$0xff]
        %v387 = vld [vmem:[%s228 + $0x98] sm:$0xff]
        %v388 = vld [vmem:[%s228 + $0xa0] sm:$0xff]
        %v389 = vld [vmem:[%s228 + $0xa8] sm:$0xff]
        %v390 = vld [vmem:[%s228 + $0xb0] sm:$0xff]
        %v391 = vld [vmem:[%s228 + $0xb8] sm:$0xff]
        %v392 = vld [vmem:[%s228 + $0xc0] sm:$0xff]
        %v393 = vld [vmem:[%s228 + $0xc8] sm:$0xff]
        %v394 = vld [vmem:[%s228 + $0xd0] sm:$0xff]
        %v395 = vld [vmem:[%s228 + $0xd8] sm:$0xff]
        %v396 = vld [vmem:[%s228 + $0xe0] sm:$0xff]
        %v397 = vld [vmem:[%s228 + $0xe8] sm:$0xff]
        %v398 = vld [vmem:[%s228 + $0xf0] sm:$0xff]
        %v399 = vld [vmem:[%s228 + $0xf8] sm:$0xff]
        %v400 = vlaneseq
        %v401 = vand.u32 %v400, 127
        %402 = vset.pattern.permute.xlu0 0
        %403 = vperm.xlu0 %402, %v368
        %v404 = vpop.permute.xlu0 %403
        %405 = vset.pattern.permute.xlu0 0
        %406 = vperm.xlu0 %405, %v369
        %v407 = vpop.permute.xlu0 %406
        %408 = vset.pattern.permute.xlu0 0
        %409 = vperm.xlu0 %408, %v370
        %v410 = vpop.permute.xlu0 %409
        %411 = vset.pattern.permute.xlu0 0
        %412 = vperm.xlu0 %411, %v371
        %v413 = vpop.permute.xlu0 %412
        %414 = vset.pattern.permute.xlu0 0
        %415 = vperm.xlu0 %414, %v372
        %v416 = vpop.permute.xlu0 %415
        %417 = vset.pattern.permute.xlu0 0
        %418 = vperm.xlu0 %417, %v373
        %v419 = vpop.permute.xlu0 %418
        %420 = vset.pattern.permute.xlu0 0
        %421 = vperm.xlu0 %420, %v374
        %v422 = vpop.permute.xlu0 %421
        %423 = vset.pattern.permute.xlu0 0
        %424 = vperm.xlu0 %423, %v375
        %v425 = vpop.permute.xlu0 %424
        %426 = vset.pattern.permute.xlu0 0
        %427 = vperm.xlu0 %426, %v376
        %v428 = vpop.permute.xlu0 %427
        %429 = vset.pattern.permute.xlu0 0
        %430 = vperm.xlu0 %429, %v377
        %v431 = vpop.permute.xlu0 %430
        %432 = vset.pattern.permute.xlu0 0
        %433 = vperm.xlu0 %432, %v378
        %v434 = vpop.permute.xlu0 %433
        %435 = vset.pattern.permute.xlu0 0
        %436 = vperm.xlu0 %435, %v379
        %v437 = vpop.permute.xlu0 %436
        %438 = vset.pattern.permute.xlu0 0
        %439 = vperm.xlu0 %438, %v380
        %v440 = vpop.permute.xlu0 %439
        %441 = vset.pattern.permute.xlu0 0
        %442 = vperm.xlu0 %441, %v381
        %v443 = vpop.permute.xlu0 %442
        %444 = vset.pattern.permute.xlu0 0
        %445 = vperm.xlu0 %444, %v382
        %v446 = vpop.permute.xlu0 %445
        %447 = vset.pattern.permute.xlu0 0
        %448 = vperm.xlu0 %447, %v383
        %v449 = vpop.permute.xlu0 %448
        %450 = vset.pattern.permute.xlu0 0
        %451 = vperm.xlu0 %450, %v384
        %v452 = vpop.permute.xlu0 %451
        %453 = vset.pattern.permute.xlu0 0
        %454 = vperm.xlu0 %453, %v385
        %v455 = vpop.permute.xlu0 %454
        %456 = vset.pattern.permute.xlu0 0
        %457 = vperm.xlu0 %456, %v386
        %v458 = vpop.permute.xlu0 %457
        %459 = vset.pattern.permute.xlu0 0
        %460 = vperm.xlu0 %459, %v387
        %v461 = vpop.permute.xlu0 %460
        %462 = vset.pattern.permute.xlu0 0
        %463 = vperm.xlu0 %462, %v388
        %v464 = vpop.permute.xlu0 %463
        %465 = vset.pattern.permute.xlu0 0
        %466 = vperm.xlu0 %465, %v389
        %v467 = vpop.permute.xlu0 %466
        %468 = vset.pattern.permute.xlu0 0
        %469 = vperm.xlu0 %468, %v390
        %v470 = vpop.permute.xlu0 %469
        %471 = vset.pattern.permute.xlu0 0
        %472 = vperm.xlu0 %471, %v391
        %v473 = vpop.permute.xlu0 %472
        %474 = vset.pattern.permute.xlu0 0
        %475 = vperm.xlu0 %474, %v392
        %v476 = vpop.permute.xlu0 %475
        %477 = vset.pattern.permute.xlu0 0
        %478 = vperm.xlu0 %477, %v393
        %v479 = vpop.permute.xlu0 %478
        %480 = vset.pattern.permute.xlu0 0
        %481 = vperm.xlu0 %480, %v394
        %v482 = vpop.permute.xlu0 %481
        %483 = vset.pattern.permute.xlu0 0
        %484 = vperm.xlu0 %483, %v395
        %v485 = vpop.permute.xlu0 %484
        %486 = vset.pattern.permute.xlu0 0
        %487 = vperm.xlu0 %486, %v396
        %v488 = vpop.permute.xlu0 %487
        %489 = vset.pattern.permute.xlu0 0
        %490 = vperm.xlu0 %489, %v397
        %v491 = vpop.permute.xlu0 %490
        %492 = vset.pattern.permute.xlu0 0
        %493 = vperm.xlu0 %492, %v398
        %v494 = vpop.permute.xlu0 %493
        %495 = vset.pattern.permute.xlu0 0
        %496 = vperm.xlu0 %495, %v399
        %v497 = vpop.permute.xlu0 %496
        %vm498 = vcmp.eq.s32.totalorder %v404, %v401
        %vm499 = vcmp.eq.s32.totalorder %v407, %v401
        %vm500 = vcmp.eq.s32.totalorder %v410, %v401
        %vm501 = vcmp.eq.s32.totalorder %v413, %v401
        %vm502 = vcmp.eq.s32.totalorder %v416, %v401
        %vm503 = vcmp.eq.s32.totalorder %v419, %v401
        %vm504 = vcmp.eq.s32.totalorder %v422, %v401
        %vm505 = vcmp.eq.s32.totalorder %v425, %v401
        %vm506 = vcmp.eq.s32.totalorder %v428, %v401
        %vm507 = vcmp.eq.s32.totalorder %v431, %v401
        %vm508 = vcmp.eq.s32.totalorder %v434, %v401
        %vm509 = vcmp.eq.s32.totalorder %v437, %v401
        %vm510 = vcmp.eq.s32.totalorder %v440, %v401
        %vm511 = vcmp.eq.s32.totalorder %v443, %v401
        %vm512 = vcmp.eq.s32.totalorder %v446, %v401
        %vm513 = vcmp.eq.s32.totalorder %v449, %v401
        %vm514 = vcmp.eq.s32.totalorder %v452, %v401
        %vm515 = vcmp.eq.s32.totalorder %v455, %v401
        %vm516 = vcmp.eq.s32.totalorder %v458, %v401
        %vm517 = vcmp.eq.s32.totalorder %v461, %v401
        %vm518 = vcmp.eq.s32.totalorder %v464, %v401
        %vm519 = vcmp.eq.s32.totalorder %v467, %v401
        %vm520 = vcmp.eq.s32.totalorder %v470, %v401
        %vm521 = vcmp.eq.s32.totalorder %v473, %v401
        %vm522 = vcmp.eq.s32.totalorder %v476, %v401
        %vm523 = vcmp.eq.s32.totalorder %v479, %v401
        %vm524 = vcmp.eq.s32.totalorder %v482, %v401
        %vm525 = vcmp.eq.s32.totalorder %v485, %v401
        %vm526 = vcmp.eq.s32.totalorder %v488, %v401
        %vm527 = vcmp.eq.s32.totalorder %v491, %v401
        %vm528 = vcmp.eq.s32.totalorder %v494, %v401
        %vm529 = vcmp.eq.s32.totalorder %v497, %v401
        %v530 = vsel %vm498, 1, 0
        %v531 = vsel %vm499, 1, 0
        %v532 = vsel %vm500, 1, 0
        %v533 = vsel %vm501, 1, 0
        %v534 = vsel %vm502, 1, 0
        %v535 = vsel %vm503, 1, 0
        %v536 = vsel %vm504, 1, 0
        %v537 = vsel %vm505, 1, 0
        %v538 = vsel %vm506, 1, 0
        %v539 = vsel %vm507, 1, 0
        %v540 = vsel %vm508, 1, 0
        %v541 = vsel %vm509, 1, 0
        %v542 = vsel %vm510, 1, 0
        %v543 = vsel %vm511, 1, 0
        %v544 = vsel %vm512, 1, 0
        %v545 = vsel %vm513, 1, 0
        %v546 = vsel %vm514, 1, 0
        %v547 = vsel %vm515, 1, 0
        %v548 = vsel %vm516, 1, 0
        %v549 = vsel %vm517, 1, 0
        %v550 = vsel %vm518, 1, 0
        %v551 = vsel %vm519, 1, 0
        %v552 = vsel %vm520, 1, 0
        %v553 = vsel %vm521, 1, 0
        %v554 = vsel %vm522, 1, 0
        %v555 = vsel %vm523, 1, 0
        %v556 = vsel %vm524, 1, 0
        %v557 = vsel %vm525, 1, 0
        %v558 = vsel %vm526, 1, 0
        %v559 = vsel %vm527, 1, 0
        %v560 = vsel %vm528, 1, 0
        %v561 = vsel %vm529, 1, 0
        %v562 = vcvt.s32.f32 %v530
        %v563 = vcvt.s32.f32 %v531
        %v564 = vcvt.s32.f32 %v532
        %v565 = vcvt.s32.f32 %v533
        %v566 = vcvt.s32.f32 %v534
        %v567 = vcvt.s32.f32 %v535
        %v568 = vcvt.s32.f32 %v536
        %v569 = vcvt.s32.f32 %v537
        %v570 = vcvt.s32.f32 %v538
        %v571 = vcvt.s32.f32 %v539
        %v572 = vcvt.s32.f32 %v540
        %v573 = vcvt.s32.f32 %v541
        %v574 = vcvt.s32.f32 %v542
        %v575 = vcvt.s32.f32 %v543
        %v576 = vcvt.s32.f32 %v544
        %v577 = vcvt.s32.f32 %v545
        %v578 = vcvt.s32.f32 %v546
        %v579 = vcvt.s32.f32 %v547
        %v580 = vcvt.s32.f32 %v548
        %v581 = vcvt.s32.f32 %v549
        %v582 = vcvt.s32.f32 %v550
        %v583 = vcvt.s32.f32 %v551
        %v584 = vcvt.s32.f32 %v552
        %v585 = vcvt.s32.f32 %v553
        %v586 = vcvt.s32.f32 %v554
        %v587 = vcvt.s32.f32 %v555
        %v588 = vcvt.s32.f32 %v556
        %v589 = vcvt.s32.f32 %v557
        %v590 = vcvt.s32.f32 %v558
        %v591 = vcvt.s32.f32 %v559
        %v592 = vcvt.s32.f32 %v560
        %v593 = vcvt.s32.f32 %v561
        %vm602 = vcmask 1041409
        %v603 = vsel %vm602, %v332, %v318
        %vm604 = vcmask 1042434
        %v605 = vsel %vm604, %v346, %v603
        %vm606 = vcmask 1043459
        %v607 = vsel %vm606, %v360, %v605
        %v608 = vsel %vm602, %v339, %v325
        %v609 = vsel %vm604, %v353, %v608
        %v610 = vsel %vm606, %v367, %v609
        %613 = vmatprep.subr.mxu0 0.0
        %614 = vmatpush1.msra.mxu0 %v562
        %615 = vmatprep.subr.mxu0 0.0
        %616 = vmatpush1.msra.mxu0 %v563
        %617 = vmatprep.subr.mxu0 0.0
        %618 = vmatpush1.msra.mxu0 %v564
        %619 = vmatprep.subr.mxu0 0.0
        %620 = vmatpush1.msra.mxu0 %v565
        %621 = vmatprep.subr.mxu0 0.0
        %622 = vmatpush1.msra.mxu0 %v566
        %623 = vmatprep.subr.mxu0 0.0
        %624 = vmatpush1.msra.mxu0 %v567
        %625 = vmatprep.subr.mxu0 0.0
        %626 = vmatpush1.msra.mxu0 %v568
        %627 = vmatprep.subr.mxu0 0.0
        %628 = vmatpush1.msra.mxu0 %v569
        %629 = vmatprep.subr.mxu0 0.0
        %630 = vmatpush1.msra.mxu0 %v570
        %631 = vmatprep.subr.mxu0 0.0
        %632 = vmatpush1.msra.mxu0 %v571
        %633 = vmatprep.subr.mxu0 0.0
        %634 = vmatpush1.msra.mxu0 %v572
        %635 = vmatprep.subr.mxu0 0.0
        %636 = vmatpush1.msra.mxu0 %v573
        %637 = vmatprep.subr.mxu0 0.0
        %638 = vmatpush1.msra.mxu0 %v574
        %639 = vmatprep.subr.mxu0 0.0
        %640 = vmatpush1.msra.mxu0 %v575
        %641 = vmatprep.subr.mxu0 0.0
        %642 = vmatpush1.msra.mxu0 %v576
        %643 = vmatprep.subr.mxu0 0.0
        %644 = vmatpush1.msra.mxu0 %v577
        %645 = vmatprep.subr.mxu0 0.0
        %646 = vmatpush1.msra.mxu0 %v578
        %647 = vmatprep.subr.mxu0 0.0
        %648 = vmatpush1.msra.mxu0 %v579
        %649 = vmatprep.subr.mxu0 0.0
        %650 = vmatpush1.msra.mxu0 %v580
        %651 = vmatprep.subr.mxu0 0.0
        %652 = vmatpush1.msra.mxu0 %v581
        %653 = vmatprep.subr.mxu0 0.0
        %654 = vmatpush1.msra.mxu0 %v582
        %655 = vmatprep.subr.mxu0 0.0
        %656 = vmatpush1.msra.mxu0 %v583
        %657 = vmatprep.subr.mxu0 0.0
        %658 = vmatpush1.msra.mxu0 %v584
        %659 = vmatprep.subr.mxu0 0.0
        %660 = vmatpush1.msra.mxu0 %v585
        %661 = vmatprep.subr.mxu0 0.0
        %662 = vmatpush1.msra.mxu0 %v586
        %663 = vmatprep.subr.mxu0 0.0
        %664 = vmatpush1.msra.mxu0 %v587
        %665 = vmatprep.subr.mxu0 0.0
        %666 = vmatpush1.msra.mxu0 %v588
        %667 = vmatprep.subr.mxu0 0.0
        %668 = vmatpush1.msra.mxu0 %v589
        %669 = vmatprep.subr.mxu0 0.0
        %670 = vmatpush1.msra.mxu0 %v590
        %671 = vmatprep.subr.mxu0 0.0
        %672 = vmatpush1.msra.mxu0 %v591
        %673 = vmatprep.subr.mxu0 0.0
        %674 = vmatpush1.msra.mxu0 %v592
        %675 = vmatprep.subr.mxu0 0.0
        %676 = vmatpush1.msra.mxu0 %v593
        %677 = vmatprep.mubr.f32.mxu0 %v610
        %678 = vmatmul.mubr.f32.gmra.mrb[0].mxu0 %v607
        %v679 = vpop.f32.mrb[0].mxu0
        %v680 = vadd.f32 0.0, %v679
        %v681 = vpop.f32.mrb[0].mxu0
        %682 = vdwg.mxu0
        %v683 = vmul.f32 %v680, 0.015625
        %vm684 = vcmask 519168
        %685 = vst.msk [vmem:[%s237] sm:$0xf] %vm684, %v683
        %p686 = scmp.lt.s32.totalorder %s17, 1
        %s687 = scalar_select %p686, %s17, 1
        %p688 = scmp.lt.s32.totalorder %s18, 3
        %s689 = scalar_select %p688, %s18, 3
        %s690 = smul.addr %s687, 4
        %s691 = sadd.s32 %s689, %s690
        %s692 = smul.addr %s691, 4
        %s693 = scalar_lea.vmem %s2, %s692
        // Predicated region
        $region67: #{decoder_forward.2} parent=61 // pred_check
          %p694 = pneg %p99
        $region68: #{decoder_forward.2} parent=61 // pred_check_branch
          %696 = sbr.rel (%p694) target = $region70
        $region69: #{decoder_forward.2} parent=61 // pred_region
          _
        $region70: #{decoder_forward.2} parent=61 // pred_fallthru
          _
      $region62: #{decoder_forward.2} parent=5 // pred_fallthru
        _
      %p697 = scmp.le.s32.totalorder 2, %s8
      // Predicated region
      $region71: #{decoder_forward.2} parent=5 // pred_check
        %p698 = pneg %p697
      $region72: #{decoder_forward.2} parent=5 // pred_check_branch
        %700 = sbr.rel (%p698) target = $region74
      $region73: #{decoder_forward.2} parent=5 // pred_region
        %s701 = ssub.s32 %s8, 2
        // Predicated region
        $region75: #{decoder_forward.2} parent=73 // pred_check
          %p702 = pneg %p105
        $region76: #{decoder_forward.2} parent=73 // pred_check_branch
          %704 = sbr.rel (%p702) target = $region78
        $region77: #{decoder_forward.2} parent=73 // pred_region
          %p705 = scmp.lt.s32.totalorder %s19, 1
          %s706 = scalar_select %p705, %s19, 1
          %p707 = scmp.lt.s32.totalorder %s20, 3
          %s708 = scalar_select %p707, %s20, 3
          %s709 = smul.addr %s706, 4
          %s710 = sadd.s32 %s708, %s709
          %s711 = smul.addr %s710, 4
          %s712 = scalar_lea.vmem %s2, %s711
        $region78: #{decoder_forward.2} parent=73 // pred_fallthru
          _
      $region74: #{decoder_forward.2} parent=5 // pred_fallthru
        _
    $region6: #{decoder_forward.2} parent=1 // loop_footer
      %s12 = sadd.s32 1, %s8
    $region7: #{decoder_forward.2} parent=1 // loop_footer_branch
      %7 = sbr.rel target = $region3
    $region8: #{decoder_forward.2} parent=1 // loop_exit
      _

</llo_original>
